<compile_context>
chip_gen: v5e
topology: v5e:2x2
jax: 0.10.0
libtpu: 0.0.40
codegen_flags: <defaults>
</compile_context>

<pallas_src>
import jax
import jax.numpy as jnp
from jax.experimental import pallas as pl
from jax.experimental.pallas import tpu as pltpu

EPS = 1e-12  # F.normalize default eps


def normal_head_kernel(x_ref, w_ref, b_ref, o_ref):
    """Per-image 3x3 conv + bias + L2-normalize over output channels.

    x_ref: (1, Cin, H+2, W+2)  VMEM  -- zero-padded input planes (channel-planar)
    w_ref: (Cout*Cin*3*3,)     SMEM  -- conv weights flattened as [co, ci, kh, kw]
    b_ref: (Cout,)             SMEM  -- conv bias
    o_ref: (1, Cout, H, W)     VMEM  -- NCHW output block
    """
    Cin = x_ref.shape[1]
    Cout = o_ref.shape[1]
    H = o_ref.shape[2]
    W = o_ref.shape[3]

    # One f32 accumulator plane per output channel, initialized with its bias
    # (scalar broadcast straight from SMEM).
    acc = [jnp.full((H, W), b_ref[co], dtype=jnp.float32) for co in range(Cout)]

    # 3x3 conv as VPU multiply-adds over shifted (H, W) windows of each input
    # plane: kh is a sublane shift, kw is a lane shift -- both near-free, no
    # im2col materialization, no MXU.
    for ci in range(Cin):
        plane = x_ref[0, ci, :, :].astype(jnp.float32)          # (H+2, W+2)
        for kh in range(3):
            for kw in range(3):
                win = jax.lax.slice(plane, (kh, kw), (kh + H, kw + W))  # (H, W)
                for co in range(Cout):
                    w = w_ref[(co * Cin + ci) * 9 + kh * 3 + kw]        # SMEM scalar
                    acc[co] = acc[co] + w * win

    # F.normalize(dim=channel, p=2): y / max(||y||_2, eps).
    # Elementwise across the Cout planes; rsqrt goes to the (otherwise idle) EUP.
    sumsq = acc[0] * acc[0]
    for co in range(1, Cout):
        sumsq = sumsq + acc[co] * acc[co]
    inv_norm = jax.lax.rsqrt(jnp.maximum(sumsq, EPS * EPS))

    for co in range(Cout):
        o_ref[0, co, :, :] = (acc[co] * inv_norm).astype(o_ref.dtype)


def normal_head_forward(x_nchw, weight, bias):
    """x_nchw: (N, Cin, H, W); weight: (Cout, Cin, 3, 3); bias: (Cout,)."""
    N, Cin, H, W = x_nchw.shape
    Cout = weight.shape[0]
    Hp, Wp = H + 2, W + 2

    # conv padding=1: zero-pad spatially once (channel-planar layout preserved).
    x_pad = jnp.pad(x_nchw, ((0, 0), (0, 0), (1, 1), (1, 1)))
    # Flatten params to 1-D so they sit densely in SMEM (no (8,128) VMEM padding).
    w_flat = weight.astype(jnp.float32).reshape(-1)
    b_flat = bias.astype(jnp.float32).reshape(-1)

    flops = 2 * N * H * W * Cout * (Cin * 9 + 2)            # conv MACs + normalize
    bytes_accessed = 4 * (N * Cin * Hp * Wp + N * Cout * H * W
                          + int(w_flat.size) + int(b_flat.size))

    return pl.pallas_call(
        normal_head_kernel,
        out_shape=jax.ShapeDtypeStruct((N, Cout, H, W), x_nchw.dtype),
        grid=(N,),
        in_specs=[
            pl.BlockSpec((1, Cin, Hp, Wp), lambda n: (n, 0, 0, 0)),
            pl.BlockSpec(memory_space=pltpu.MemorySpace.SMEM),
            pl.BlockSpec(memory_space=pltpu.MemorySpace.SMEM),
        ],
        out_specs=pl.BlockSpec((1, Cout, H, W), lambda n: (n, 0, 0, 0)),
        compiler_params=pltpu.CompilerParams(
            dimension_semantics=("parallel",),
            vmem_limit_bytes=32 * 1024 * 1024,
        ),
        cost_estimate=pl.CostEstimate(
            flops=flops,
            transcendentals=N * H * W,
            bytes_accessed=bytes_accessed,
        ),
    )(x_pad, w_flat, b_flat)


def _reference(x_nchw, weight, bias):
    """Pure-JAX reference of the PyTorch forward (for the correctness check)."""
    y = jax.lax.conv_general_dilated(
        x_nchw, weight,
        window_strides=(1, 1), padding=((1, 1), (1, 1)),
        dimension_numbers=("NCHW", "OIHW", "NCHW"),
    ) + bias.reshape(1, -1, 1, 1)
    norm = jnp.sqrt(jnp.sum(y * y, axis=1, keepdims=True))
    return y / jnp.maximum(norm, EPS)


if __name__ == "__main__":
    # Small shapes consistent with the module (input_dim -> 3 output channels).
    N, Cin, H, W = 2, 4, 16, 16
    Cout = 3

    key = jax.random.PRNGKey(0)
    kx, kw, kb = jax.random.split(key, 3)
    x = jax.random.normal(kx, (N, Cin, H, W), dtype=jnp.float32)
    weight = jax.random.normal(kw, (Cout, Cin, 3, 3), dtype=jnp.float32) * 0.1
    bias = jax.random.normal(kb, (Cout,), dtype=jnp.float32) * 0.1

    out = jax.block_until_ready(normal_head_forward(x, weight, bias))

    ref = jax.block_until_ready(_reference(x, weight, bias))
    assert out.shape == (N, Cout, H, W)
    # rtol loose enough for EUP rsqrt vs the reference's sqrt+divide path.
    assert jnp.allclose(out, ref, atol=1e-5, rtol=1e-4), "mismatch vs reference"

    print("KERNEL_OK")
</pallas_src>

<mosaic_0001>
module attributes {stable_mosaic.version = 11 : i64} {
  func.func @normal_head_kernel(%arg0: i32, %arg1: memref<1x4x18x18xf32, #tpu.memory_space<vmem>>, %arg2: memref<108xf32, #tpu.memory_space<smem>>, %arg3: memref<3xf32, #tpu.memory_space<smem>>, %arg4: memref<1x3x16x16xf32, #tpu.memory_space<vmem>>) attributes {dimension_semantics = [#tpu.dimension_semantics<parallel>], iteration_bounds = array<i64: 2>, scalar_prefetch = 0 : i64, scratch_operands = 0 : i64, tpu.core_type = #tpu.core_type<tc>, window_params = [{transform_indices = @transform_0, window_bounds = array<i64: 1, 4, 18, 18>}, {transform_indices = @transform_1, window_bounds = array<i64: 108>}, {transform_indices = @transform_2, window_bounds = array<i64: 3>}, {transform_indices = @transform_3, window_bounds = array<i64: 1, 3, 16, 16>}]} {
    %c0 = arith.constant 0 : index
    %0 = memref.load %arg3[%c0] : memref<3xf32, #tpu.memory_space<smem>>
    %1 = vector.broadcast %0 : f32 to vector<16x16xf32>
    %c1 = arith.constant 1 : index
    %2 = memref.load %arg3[%c1] : memref<3xf32, #tpu.memory_space<smem>>
    %3 = vector.broadcast %2 : f32 to vector<16x16xf32>
    %c2 = arith.constant 2 : index
    %4 = memref.load %arg3[%c2] : memref<3xf32, #tpu.memory_space<smem>>
    %5 = vector.broadcast %4 : f32 to vector<16x16xf32>
    %c0_0 = arith.constant 0 : index
    %c0_1 = arith.constant 0 : index
    %c0_2 = arith.constant 0 : index
    %c0_3 = arith.constant 0 : index
    %6 = vector.load %arg1[%c0_0, %c0_1, %c0_2, %c0_3] : memref<1x4x18x18xf32, #tpu.memory_space<vmem>>, vector<1x1x18x18xf32>
    %7 = vector.shape_cast %6 : vector<1x1x18x18xf32> to vector<18x18xf32>
    %8 = vector.extract_strided_slice %7 {offsets = [0, 0], sizes = [16, 16], strides = [1, 1]} : vector<18x18xf32> to vector<16x16xf32>
    %c0_4 = arith.constant 0 : index
    %9 = memref.load %arg2[%c0_4] : memref<108xf32, #tpu.memory_space<smem>>
    %10 = vector.broadcast %9 : f32 to vector<16x16xf32>
    %11 = arith.mulf %10, %8 : vector<16x16xf32>
    %12 = arith.addf %1, %11 : vector<16x16xf32>
    %c36 = arith.constant 36 : index
    %13 = memref.load %arg2[%c36] : memref<108xf32, #tpu.memory_space<smem>>
    %14 = vector.broadcast %13 : f32 to vector<16x16xf32>
    %15 = arith.mulf %14, %8 : vector<16x16xf32>
    %16 = arith.addf %3, %15 : vector<16x16xf32>
    %c72 = arith.constant 72 : index
    %17 = memref.load %arg2[%c72] : memref<108xf32, #tpu.memory_space<smem>>
    %18 = vector.broadcast %17 : f32 to vector<16x16xf32>
    %19 = arith.mulf %18, %8 : vector<16x16xf32>
    %20 = arith.addf %5, %19 : vector<16x16xf32>
    %21 = vector.extract_strided_slice %7 {offsets = [0, 1], sizes = [16, 16], strides = [1, 1]} : vector<18x18xf32> to vector<16x16xf32>
    %c1_5 = arith.constant 1 : index
    %22 = memref.load %arg2[%c1_5] : memref<108xf32, #tpu.memory_space<smem>>
    %23 = vector.broadcast %22 : f32 to vector<16x16xf32>
    %24 = arith.mulf %23, %21 : vector<16x16xf32>
    %25 = arith.addf %12, %24 : vector<16x16xf32>
    %c37 = arith.constant 37 : index
    %26 = memref.load %arg2[%c37] : memref<108xf32, #tpu.memory_space<smem>>
    %27 = vector.broadcast %26 : f32 to vector<16x16xf32>
    %28 = arith.mulf %27, %21 : vector<16x16xf32>
    %29 = arith.addf %16, %28 : vector<16x16xf32>
    %c73 = arith.constant 73 : index
    %30 = memref.load %arg2[%c73] : memref<108xf32, #tpu.memory_space<smem>>
    %31 = vector.broadcast %30 : f32 to vector<16x16xf32>
    %32 = arith.mulf %31, %21 : vector<16x16xf32>
    %33 = arith.addf %20, %32 : vector<16x16xf32>
    %34 = vector.extract_strided_slice %7 {offsets = [0, 2], sizes = [16, 16], strides = [1, 1]} : vector<18x18xf32> to vector<16x16xf32>
    %c2_6 = arith.constant 2 : index
    %35 = memref.load %arg2[%c2_6] : memref<108xf32, #tpu.memory_space<smem>>
    %36 = vector.broadcast %35 : f32 to vector<16x16xf32>
    %37 = arith.mulf %36, %34 : vector<16x16xf32>
    %38 = arith.addf %25, %37 : vector<16x16xf32>
    %c38 = arith.constant 38 : index
    %39 = memref.load %arg2[%c38] : memref<108xf32, #tpu.memory_space<smem>>
    %40 = vector.broadcast %39 : f32 to vector<16x16xf32>
    %41 = arith.mulf %40, %34 : vector<16x16xf32>
    %42 = arith.addf %29, %41 : vector<16x16xf32>
    %c74 = arith.constant 74 : index
    %43 = memref.load %arg2[%c74] : memref<108xf32, #tpu.memory_space<smem>>
    %44 = vector.broadcast %43 : f32 to vector<16x16xf32>
    %45 = arith.mulf %44, %34 : vector<16x16xf32>
    %46 = arith.addf %33, %45 : vector<16x16xf32>
    %47 = vector.extract_strided_slice %7 {offsets = [1, 0], sizes = [16, 16], strides = [1, 1]} : vector<18x18xf32> to vector<16x16xf32>
    %c3 = arith.constant 3 : index
    %48 = memref.load %arg2[%c3] : memref<108xf32, #tpu.memory_space<smem>>
    %49 = vector.broadcast %48 : f32 to vector<16x16xf32>
    %50 = arith.mulf %49, %47 : vector<16x16xf32>
    %51 = arith.addf %38, %50 : vector<16x16xf32>
    %c39 = arith.constant 39 : index
    %52 = memref.load %arg2[%c39] : memref<108xf32, #tpu.memory_space<smem>>
    %53 = vector.broadcast %52 : f32 to vector<16x16xf32>
    %54 = arith.mulf %53, %47 : vector<16x16xf32>
    %55 = arith.addf %42, %54 : vector<16x16xf32>
    %c75 = arith.constant 75 : index
    %56 = memref.load %arg2[%c75] : memref<108xf32, #tpu.memory_space<smem>>
    %57 = vector.broadcast %56 : f32 to vector<16x16xf32>
    %58 = arith.mulf %57, %47 : vector<16x16xf32>
    %59 = arith.addf %46, %58 : vector<16x16xf32>
    %60 = vector.extract_strided_slice %7 {offsets = [1, 1], sizes = [16, 16], strides = [1, 1]} : vector<18x18xf32> to vector<16x16xf32>
    %c4 = arith.constant 4 : index
    %61 = memref.load %arg2[%c4] : memref<108xf32, #tpu.memory_space<smem>>
    %62 = vector.broadcast %61 : f32 to vector<16x16xf32>
    %63 = arith.mulf %62, %60 : vector<16x16xf32>
    %64 = arith.addf %51, %63 : vector<16x16xf32>
    %c40 = arith.constant 40 : index
    %65 = memref.load %arg2[%c40] : memref<108xf32, #tpu.memory_space<smem>>
    %66 = vector.broadcast %65 : f32 to vector<16x16xf32>
    %67 = arith.mulf %66, %60 : vector<16x16xf32>
    %68 = arith.addf %55, %67 : vector<16x16xf32>
    %c76 = arith.constant 76 : index
    %69 = memref.load %arg2[%c76] : memref<108xf32, #tpu.memory_space<smem>>
    %70 = vector.broadcast %69 : f32 to vector<16x16xf32>
    %71 = arith.mulf %70, %60 : vector<16x16xf32>
    %72 = arith.addf %59, %71 : vector<16x16xf32>
    %73 = vector.extract_strided_slice %7 {offsets = [1, 2], sizes = [16, 16], strides = [1, 1]} : vector<18x18xf32> to vector<16x16xf32>
    %c5 = arith.constant 5 : index
    %74 = memref.load %arg2[%c5] : memref<108xf32, #tpu.memory_space<smem>>
    %75 = vector.broadcast %74 : f32 to vector<16x16xf32>
    %76 = arith.mulf %75, %73 : vector<16x16xf32>
    %77 = arith.addf %64, %76 : vector<16x16xf32>
    %c41 = arith.constant 41 : index
    %78 = memref.load %arg2[%c41] : memref<108xf32, #tpu.memory_space<smem>>
    %79 = vector.broadcast %78 : f32 to vector<16x16xf32>
    %80 = arith.mulf %79, %73 : vector<16x16xf32>
    %81 = arith.addf %68, %80 : vector<16x16xf32>
    %c77 = arith.constant 77 : index
    %82 = memref.load %arg2[%c77] : memref<108xf32, #tpu.memory_space<smem>>
    %83 = vector.broadcast %82 : f32 to vector<16x16xf32>
    %84 = arith.mulf %83, %73 : vector<16x16xf32>
    %85 = arith.addf %72, %84 : vector<16x16xf32>
    %86 = vector.extract_strided_slice %7 {offsets = [2, 0], sizes = [16, 16], strides = [1, 1]} : vector<18x18xf32> to vector<16x16xf32>
    %c6 = arith.constant 6 : index
    %87 = memref.load %arg2[%c6] : memref<108xf32, #tpu.memory_space<smem>>
    %88 = vector.broadcast %87 : f32 to vector<16x16xf32>
    %89 = arith.mulf %88, %86 : vector<16x16xf32>
    %90 = arith.addf %77, %89 : vector<16x16xf32>
    %c42 = arith.constant 42 : index
    %91 = memref.load %arg2[%c42] : memref<108xf32, #tpu.memory_space<smem>>
    %92 = vector.broadcast %91 : f32 to vector<16x16xf32>
    %93 = arith.mulf %92, %86 : vector<16x16xf32>
    %94 = arith.addf %81, %93 : vector<16x16xf32>
    %c78 = arith.constant 78 : index
    %95 = memref.load %arg2[%c78] : memref<108xf32, #tpu.memory_space<smem>>
    %96 = vector.broadcast %95 : f32 to vector<16x16xf32>
    %97 = arith.mulf %96, %86 : vector<16x16xf32>
    %98 = arith.addf %85, %97 : vector<16x16xf32>
    %99 = vector.extract_strided_slice %7 {offsets = [2, 1], sizes = [16, 16], strides = [1, 1]} : vector<18x18xf32> to vector<16x16xf32>
    %c7 = arith.constant 7 : index
    %100 = memref.load %arg2[%c7] : memref<108xf32, #tpu.memory_space<smem>>
    %101 = vector.broadcast %100 : f32 to vector<16x16xf32>
    %102 = arith.mulf %101, %99 : vector<16x16xf32>
    %103 = arith.addf %90, %102 : vector<16x16xf32>
    %c43 = arith.constant 43 : index
    %104 = memref.load %arg2[%c43] : memref<108xf32, #tpu.memory_space<smem>>
    %105 = vector.broadcast %104 : f32 to vector<16x16xf32>
    %106 = arith.mulf %105, %99 : vector<16x16xf32>
    %107 = arith.addf %94, %106 : vector<16x16xf32>
    %c79 = arith.constant 79 : index
    %108 = memref.load %arg2[%c79] : memref<108xf32, #tpu.memory_space<smem>>
    %109 = vector.broadcast %108 : f32 to vector<16x16xf32>
    %110 = arith.mulf %109, %99 : vector<16x16xf32>
    %111 = arith.addf %98, %110 : vector<16x16xf32>
    %112 = vector.extract_strided_slice %7 {offsets = [2, 2], sizes = [16, 16], strides = [1, 1]} : vector<18x18xf32> to vector<16x16xf32>
    %c8 = arith.constant 8 : index
    %113 = memref.load %arg2[%c8] : memref<108xf32, #tpu.memory_space<smem>>
    %114 = vector.broadcast %113 : f32 to vector<16x16xf32>
    %115 = arith.mulf %114, %112 : vector<16x16xf32>
    %116 = arith.addf %103, %115 : vector<16x16xf32>
    %c44 = arith.constant 44 : index
    %117 = memref.load %arg2[%c44] : memref<108xf32, #tpu.memory_space<smem>>
    %118 = vector.broadcast %117 : f32 to vector<16x16xf32>
    %119 = arith.mulf %118, %112 : vector<16x16xf32>
    %120 = arith.addf %107, %119 : vector<16x16xf32>
    %c80 = arith.constant 80 : index
    %121 = memref.load %arg2[%c80] : memref<108xf32, #tpu.memory_space<smem>>
    %122 = vector.broadcast %121 : f32 to vector<16x16xf32>
    %123 = arith.mulf %122, %112 : vector<16x16xf32>
    %124 = arith.addf %111, %123 : vector<16x16xf32>
    %c0_7 = arith.constant 0 : index
    %c1_8 = arith.constant 1 : index
    %c0_9 = arith.constant 0 : index
    %c0_10 = arith.constant 0 : index
    %125 = vector.load %arg1[%c0_7, %c1_8, %c0_9, %c0_10] : memref<1x4x18x18xf32, #tpu.memory_space<vmem>>, vector<1x1x18x18xf32>
    %126 = vector.shape_cast %125 : vector<1x1x18x18xf32> to vector<18x18xf32>
    %127 = vector.extract_strided_slice %126 {offsets = [0, 0], sizes = [16, 16], strides = [1, 1]} : vector<18x18xf32> to vector<16x16xf32>
    %c9 = arith.constant 9 : index
    %128 = memref.load %arg2[%c9] : memref<108xf32, #tpu.memory_space<smem>>
    %129 = vector.broadcast %128 : f32 to vector<16x16xf32>
    %130 = arith.mulf %129, %127 : vector<16x16xf32>
    %131 = arith.addf %116, %130 : vector<16x16xf32>
    %c45 = arith.constant 45 : index
    %132 = memref.load %arg2[%c45] : memref<108xf32, #tpu.memory_space<smem>>
    %133 = vector.broadcast %132 : f32 to vector<16x16xf32>
    %134 = arith.mulf %133, %127 : vector<16x16xf32>
    %135 = arith.addf %120, %134 : vector<16x16xf32>
    %c81 = arith.constant 81 : index
    %136 = memref.load %arg2[%c81] : memref<108xf32, #tpu.memory_space<smem>>
    %137 = vector.broadcast %136 : f32 to vector<16x16xf32>
    %138 = arith.mulf %137, %127 : vector<16x16xf32>
    %139 = arith.addf %124, %138 : vector<16x16xf32>
    %140 = vector.extract_strided_slice %126 {offsets = [0, 1], sizes = [16, 16], strides = [1, 1]} : vector<18x18xf32> to vector<16x16xf32>
    %c10 = arith.constant 10 : index
    %141 = memref.load %arg2[%c10] : memref<108xf32, #tpu.memory_space<smem>>
    %142 = vector.broadcast %141 : f32 to vector<16x16xf32>
    %143 = arith.mulf %142, %140 : vector<16x16xf32>
    %144 = arith.addf %131, %143 : vector<16x16xf32>
    %c46 = arith.constant 46 : index
    %145 = memref.load %arg2[%c46] : memref<108xf32, #tpu.memory_space<smem>>
    %146 = vector.broadcast %145 : f32 to vector<16x16xf32>
    %147 = arith.mulf %146, %140 : vector<16x16xf32>
    %148 = arith.addf %135, %147 : vector<16x16xf32>
    %c82 = arith.constant 82 : index
    %149 = memref.load %arg2[%c82] : memref<108xf32, #tpu.memory_space<smem>>
    %150 = vector.broadcast %149 : f32 to vector<16x16xf32>
    %151 = arith.mulf %150, %140 : vector<16x16xf32>
    %152 = arith.addf %139, %151 : vector<16x16xf32>
    %153 = vector.extract_strided_slice %126 {offsets = [0, 2], sizes = [16, 16], strides = [1, 1]} : vector<18x18xf32> to vector<16x16xf32>
    %c11 = arith.constant 11 : index
    %154 = memref.load %arg2[%c11] : memref<108xf32, #tpu.memory_space<smem>>
    %155 = vector.broadcast %154 : f32 to vector<16x16xf32>
    %156 = arith.mulf %155, %153 : vector<16x16xf32>
    %157 = arith.addf %144, %156 : vector<16x16xf32>
    %c47 = arith.constant 47 : index
    %158 = memref.load %arg2[%c47] : memref<108xf32, #tpu.memory_space<smem>>
    %159 = vector.broadcast %158 : f32 to vector<16x16xf32>
    %160 = arith.mulf %159, %153 : vector<16x16xf32>
    %161 = arith.addf %148, %160 : vector<16x16xf32>
    %c83 = arith.constant 83 : index
    %162 = memref.load %arg2[%c83] : memref<108xf32, #tpu.memory_space<smem>>
    %163 = vector.broadcast %162 : f32 to vector<16x16xf32>
    %164 = arith.mulf %163, %153 : vector<16x16xf32>
    %165 = arith.addf %152, %164 : vector<16x16xf32>
    %166 = vector.extract_strided_slice %126 {offsets = [1, 0], sizes = [16, 16], strides = [1, 1]} : vector<18x18xf32> to vector<16x16xf32>
    %c12 = arith.constant 12 : index
    %167 = memref.load %arg2[%c12] : memref<108xf32, #tpu.memory_space<smem>>
    %168 = vector.broadcast %167 : f32 to vector<16x16xf32>
    %169 = arith.mulf %168, %166 : vector<16x16xf32>
    %170 = arith.addf %157, %169 : vector<16x16xf32>
    %c48 = arith.constant 48 : index
    %171 = memref.load %arg2[%c48] : memref<108xf32, #tpu.memory_space<smem>>
    %172 = vector.broadcast %171 : f32 to vector<16x16xf32>
    %173 = arith.mulf %172, %166 : vector<16x16xf32>
    %174 = arith.addf %161, %173 : vector<16x16xf32>
    %c84 = arith.constant 84 : index
    %175 = memref.load %arg2[%c84] : memref<108xf32, #tpu.memory_space<smem>>
    %176 = vector.broadcast %175 : f32 to vector<16x16xf32>
    %177 = arith.mulf %176, %166 : vector<16x16xf32>
    %178 = arith.addf %165, %177 : vector<16x16xf32>
    %179 = vector.extract_strided_slice %126 {offsets = [1, 1], sizes = [16, 16], strides = [1, 1]} : vector<18x18xf32> to vector<16x16xf32>
    %c13 = arith.constant 13 : index
    %180 = memref.load %arg2[%c13] : memref<108xf32, #tpu.memory_space<smem>>
    %181 = vector.broadcast %180 : f32 to vector<16x16xf32>
    %182 = arith.mulf %181, %179 : vector<16x16xf32>
    %183 = arith.addf %170, %182 : vector<16x16xf32>
    %c49 = arith.constant 49 : index
    %184 = memref.load %arg2[%c49] : memref<108xf32, #tpu.memory_space<smem>>
    %185 = vector.broadcast %184 : f32 to vector<16x16xf32>
    %186 = arith.mulf %185, %179 : vector<16x16xf32>
    %187 = arith.addf %174, %186 : vector<16x16xf32>
    %c85 = arith.constant 85 : index
    %188 = memref.load %arg2[%c85] : memref<108xf32, #tpu.memory_space<smem>>
    %189 = vector.broadcast %188 : f32 to vector<16x16xf32>
    %190 = arith.mulf %189, %179 : vector<16x16xf32>
    %191 = arith.addf %178, %190 : vector<16x16xf32>
    %192 = vector.extract_strided_slice %126 {offsets = [1, 2], sizes = [16, 16], strides = [1, 1]} : vector<18x18xf32> to vector<16x16xf32>
    %c14 = arith.constant 14 : index
    %193 = memref.load %arg2[%c14] : memref<108xf32, #tpu.memory_space<smem>>
    %194 = vector.broadcast %193 : f32 to vector<16x16xf32>
    %195 = arith.mulf %194, %192 : vector<16x16xf32>
    %196 = arith.addf %183, %195 : vector<16x16xf32>
    %c50 = arith.constant 50 : index
    %197 = memref.load %arg2[%c50] : memref<108xf32, #tpu.memory_space<smem>>
    %198 = vector.broadcast %197 : f32 to vector<16x16xf32>
    %199 = arith.mulf %198, %192 : vector<16x16xf32>
    %200 = arith.addf %187, %199 : vector<16x16xf32>
    %c86 = arith.constant 86 : index
    %201 = memref.load %arg2[%c86] : memref<108xf32, #tpu.memory_space<smem>>
    %202 = vector.broadcast %201 : f32 to vector<16x16xf32>
    %203 = arith.mulf %202, %192 : vector<16x16xf32>
    %204 = arith.addf %191, %203 : vector<16x16xf32>
    %205 = vector.extract_strided_slice %126 {offsets = [2, 0], sizes = [16, 16], strides = [1, 1]} : vector<18x18xf32> to vector<16x16xf32>
    %c15 = arith.constant 15 : index
    %206 = memref.load %arg2[%c15] : memref<108xf32, #tpu.memory_space<smem>>
    %207 = vector.broadcast %206 : f32 to vector<16x16xf32>
    %208 = arith.mulf %207, %205 : vector<16x16xf32>
    %209 = arith.addf %196, %208 : vector<16x16xf32>
    %c51 = arith.constant 51 : index
    %210 = memref.load %arg2[%c51] : memref<108xf32, #tpu.memory_space<smem>>
    %211 = vector.broadcast %210 : f32 to vector<16x16xf32>
    %212 = arith.mulf %211, %205 : vector<16x16xf32>
    %213 = arith.addf %200, %212 : vector<16x16xf32>
    %c87 = arith.constant 87 : index
    %214 = memref.load %arg2[%c87] : memref<108xf32, #tpu.memory_space<smem>>
    %215 = vector.broadcast %214 : f32 to vector<16x16xf32>
    %216 = arith.mulf %215, %205 : vector<16x16xf32>
    %217 = arith.addf %204, %216 : vector<16x16xf32>
    %218 = vector.extract_strided_slice %126 {offsets = [2, 1], sizes = [16, 16], strides = [1, 1]} : vector<18x18xf32> to vector<16x16xf32>
    %c16 = arith.constant 16 : index
    %219 = memref.load %arg2[%c16] : memref<108xf32, #tpu.memory_space<smem>>
    %220 = vector.broadcast %219 : f32 to vector<16x16xf32>
    %221 = arith.mulf %220, %218 : vector<16x16xf32>
    %222 = arith.addf %209, %221 : vector<16x16xf32>
    %c52 = arith.constant 52 : index
    %223 = memref.load %arg2[%c52] : memref<108xf32, #tpu.memory_space<smem>>
    %224 = vector.broadcast %223 : f32 to vector<16x16xf32>
    %225 = arith.mulf %224, %218 : vector<16x16xf32>
    %226 = arith.addf %213, %225 : vector<16x16xf32>
    %c88 = arith.constant 88 : index
    %227 = memref.load %arg2[%c88] : memref<108xf32, #tpu.memory_space<smem>>
    %228 = vector.broadcast %227 : f32 to vector<16x16xf32>
    %229 = arith.mulf %228, %218 : vector<16x16xf32>
    %230 = arith.addf %217, %229 : vector<16x16xf32>
    %231 = vector.extract_strided_slice %126 {offsets = [2, 2], sizes = [16, 16], strides = [1, 1]} : vector<18x18xf32> to vector<16x16xf32>
    %c17 = arith.constant 17 : index
    %232 = memref.load %arg2[%c17] : memref<108xf32, #tpu.memory_space<smem>>
    %233 = vector.broadcast %232 : f32 to vector<16x16xf32>
    %234 = arith.mulf %233, %231 : vector<16x16xf32>
    %235 = arith.addf %222, %234 : vector<16x16xf32>
    %c53 = arith.constant 53 : index
    %236 = memref.load %arg2[%c53] : memref<108xf32, #tpu.memory_space<smem>>
    %237 = vector.broadcast %236 : f32 to vector<16x16xf32>
    %238 = arith.mulf %237, %231 : vector<16x16xf32>
    %239 = arith.addf %226, %238 : vector<16x16xf32>
    %c89 = arith.constant 89 : index
    %240 = memref.load %arg2[%c89] : memref<108xf32, #tpu.memory_space<smem>>
    %241 = vector.broadcast %240 : f32 to vector<16x16xf32>
    %242 = arith.mulf %241, %231 : vector<16x16xf32>
    %243 = arith.addf %230, %242 : vector<16x16xf32>
    %c0_11 = arith.constant 0 : index
    %c2_12 = arith.constant 2 : index
    %c0_13 = arith.constant 0 : index
    %c0_14 = arith.constant 0 : index
    %244 = vector.load %arg1[%c0_11, %c2_12, %c0_13, %c0_14] : memref<1x4x18x18xf32, #tpu.memory_space<vmem>>, vector<1x1x18x18xf32>
    %245 = vector.shape_cast %244 : vector<1x1x18x18xf32> to vector<18x18xf32>
    %246 = vector.extract_strided_slice %245 {offsets = [0, 0], sizes = [16, 16], strides = [1, 1]} : vector<18x18xf32> to vector<16x16xf32>
    %c18 = arith.constant 18 : index
    %247 = memref.load %arg2[%c18] : memref<108xf32, #tpu.memory_space<smem>>
    %248 = vector.broadcast %247 : f32 to vector<16x16xf32>
    %249 = arith.mulf %248, %246 : vector<16x16xf32>
    %250 = arith.addf %235, %249 : vector<16x16xf32>
    %c54 = arith.constant 54 : index
    %251 = memref.load %arg2[%c54] : memref<108xf32, #tpu.memory_space<smem>>
    %252 = vector.broadcast %251 : f32 to vector<16x16xf32>
    %253 = arith.mulf %252, %246 : vector<16x16xf32>
    %254 = arith.addf %239, %253 : vector<16x16xf32>
    %c90 = arith.constant 90 : index
    %255 = memref.load %arg2[%c90] : memref<108xf32, #tpu.memory_space<smem>>
    %256 = vector.broadcast %255 : f32 to vector<16x16xf32>
    %257 = arith.mulf %256, %246 : vector<16x16xf32>
    %258 = arith.addf %243, %257 : vector<16x16xf32>
    %259 = vector.extract_strided_slice %245 {offsets = [0, 1], sizes = [16, 16], strides = [1, 1]} : vector<18x18xf32> to vector<16x16xf32>
    %c19 = arith.constant 19 : index
    %260 = memref.load %arg2[%c19] : memref<108xf32, #tpu.memory_space<smem>>
    %261 = vector.broadcast %260 : f32 to vector<16x16xf32>
    %262 = arith.mulf %261, %259 : vector<16x16xf32>
    %263 = arith.addf %250, %262 : vector<16x16xf32>
    %c55 = arith.constant 55 : index
    %264 = memref.load %arg2[%c55] : memref<108xf32, #tpu.memory_space<smem>>
    %265 = vector.broadcast %264 : f32 to vector<16x16xf32>
    %266 = arith.mulf %265, %259 : vector<16x16xf32>
    %267 = arith.addf %254, %266 : vector<16x16xf32>
    %c91 = arith.constant 91 : index
    %268 = memref.load %arg2[%c91] : memref<108xf32, #tpu.memory_space<smem>>
    %269 = vector.broadcast %268 : f32 to vector<16x16xf32>
    %270 = arith.mulf %269, %259 : vector<16x16xf32>
    %271 = arith.addf %258, %270 : vector<16x16xf32>
    %272 = vector.extract_strided_slice %245 {offsets = [0, 2], sizes = [16, 16], strides = [1, 1]} : vector<18x18xf32> to vector<16x16xf32>
    %c20 = arith.constant 20 : index
    %273 = memref.load %arg2[%c20] : memref<108xf32, #tpu.memory_space<smem>>
    %274 = vector.broadcast %273 : f32 to vector<16x16xf32>
    %275 = arith.mulf %274, %272 : vector<16x16xf32>
    %276 = arith.addf %263, %275 : vector<16x16xf32>
    %c56 = arith.constant 56 : index
    %277 = memref.load %arg2[%c56] : memref<108xf32, #tpu.memory_space<smem>>
    %278 = vector.broadcast %277 : f32 to vector<16x16xf32>
    %279 = arith.mulf %278, %272 : vector<16x16xf32>
    %280 = arith.addf %267, %279 : vector<16x16xf32>
    %c92 = arith.constant 92 : index
    %281 = memref.load %arg2[%c92] : memref<108xf32, #tpu.memory_space<smem>>
    %282 = vector.broadcast %281 : f32 to vector<16x16xf32>
    %283 = arith.mulf %282, %272 : vector<16x16xf32>
    %284 = arith.addf %271, %283 : vector<16x16xf32>
    %285 = vector.extract_strided_slice %245 {offsets = [1, 0], sizes = [16, 16], strides = [1, 1]} : vector<18x18xf32> to vector<16x16xf32>
    %c21 = arith.constant 21 : index
    %286 = memref.load %arg2[%c21] : memref<108xf32, #tpu.memory_space<smem>>
    %287 = vector.broadcast %286 : f32 to vector<16x16xf32>
    %288 = arith.mulf %287, %285 : vector<16x16xf32>
    %289 = arith.addf %276, %288 : vector<16x16xf32>
    %c57 = arith.constant 57 : index
    %290 = memref.load %arg2[%c57] : memref<108xf32, #tpu.memory_space<smem>>
    %291 = vector.broadcast %290 : f32 to vector<16x16xf32>
    %292 = arith.mulf %291, %285 : vector<16x16xf32>
    %293 = arith.addf %280, %292 : vector<16x16xf32>
    %c93 = arith.constant 93 : index
    %294 = memref.load %arg2[%c93] : memref<108xf32, #tpu.memory_space<smem>>
    %295 = vector.broadcast %294 : f32 to vector<16x16xf32>
    %296 = arith.mulf %295, %285 : vector<16x16xf32>
    %297 = arith.addf %284, %296 : vector<16x16xf32>
    %298 = vector.extract_strided_slice %245 {offsets = [1, 1], sizes = [16, 16], strides = [1, 1]} : vector<18x18xf32> to vector<16x16xf32>
    %c22 = arith.constant 22 : index
    %299 = memref.load %arg2[%c22] : memref<108xf32, #tpu.memory_space<smem>>
    %300 = vector.broadcast %299 : f32 to vector<16x16xf32>
    %301 = arith.mulf %300, %298 : vector<16x16xf32>
    %302 = arith.addf %289, %301 : vector<16x16xf32>
    %c58 = arith.constant 58 : index
    %303 = memref.load %arg2[%c58] : memref<108xf32, #tpu.memory_space<smem>>
    %304 = vector.broadcast %303 : f32 to vector<16x16xf32>
    %305 = arith.mulf %304, %298 : vector<16x16xf32>
    %306 = arith.addf %293, %305 : vector<16x16xf32>
    %c94 = arith.constant 94 : index
    %307 = memref.load %arg2[%c94] : memref<108xf32, #tpu.memory_space<smem>>
    %308 = vector.broadcast %307 : f32 to vector<16x16xf32>
    %309 = arith.mulf %308, %298 : vector<16x16xf32>
    %310 = arith.addf %297, %309 : vector<16x16xf32>
    %311 = vector.extract_strided_slice %245 {offsets = [1, 2], sizes = [16, 16], strides = [1, 1]} : vector<18x18xf32> to vector<16x16xf32>
    %c23 = arith.constant 23 : index
    %312 = memref.load %arg2[%c23] : memref<108xf32, #tpu.memory_space<smem>>
    %313 = vector.broadcast %312 : f32 to vector<16x16xf32>
    %314 = arith.mulf %313, %311 : vector<16x16xf32>
    %315 = arith.addf %302, %314 : vector<16x16xf32>
    %c59 = arith.constant 59 : index
    %316 = memref.load %arg2[%c59] : memref<108xf32, #tpu.memory_space<smem>>
    %317 = vector.broadcast %316 : f32 to vector<16x16xf32>
    %318 = arith.mulf %317, %311 : vector<16x16xf32>
    %319 = arith.addf %306, %318 : vector<16x16xf32>
    %c95 = arith.constant 95 : index
    %320 = memref.load %arg2[%c95] : memref<108xf32, #tpu.memory_space<smem>>
    %321 = vector.broadcast %320 : f32 to vector<16x16xf32>
    %322 = arith.mulf %321, %311 : vector<16x16xf32>
    %323 = arith.addf %310, %322 : vector<16x16xf32>
    %324 = vector.extract_strided_slice %245 {offsets = [2, 0], sizes = [16, 16], strides = [1, 1]} : vector<18x18xf32> to vector<16x16xf32>
    %c24 = arith.constant 24 : index
    %325 = memref.load %arg2[%c24] : memref<108xf32, #tpu.memory_space<smem>>
    %326 = vector.broadcast %325 : f32 to vector<16x16xf32>
    %327 = arith.mulf %326, %324 : vector<16x16xf32>
    %328 = arith.addf %315, %327 : vector<16x16xf32>
    %c60 = arith.constant 60 : index
    %329 = memref.load %arg2[%c60] : memref<108xf32, #tpu.memory_space<smem>>
    %330 = vector.broadcast %329 : f32 to vector<16x16xf32>
    %331 = arith.mulf %330, %324 : vector<16x16xf32>
    %332 = arith.addf %319, %331 : vector<16x16xf32>
    %c96 = arith.constant 96 : index
    %333 = memref.load %arg2[%c96] : memref<108xf32, #tpu.memory_space<smem>>
    %334 = vector.broadcast %333 : f32 to vector<16x16xf32>
    %335 = arith.mulf %334, %324 : vector<16x16xf32>
    %336 = arith.addf %323, %335 : vector<16x16xf32>
    %337 = vector.extract_strided_slice %245 {offsets = [2, 1], sizes = [16, 16], strides = [1, 1]} : vector<18x18xf32> to vector<16x16xf32>
    %c25 = arith.constant 25 : index
    %338 = memref.load %arg2[%c25] : memref<108xf32, #tpu.memory_space<smem>>
    %339 = vector.broadcast %338 : f32 to vector<16x16xf32>
    %340 = arith.mulf %339, %337 : vector<16x16xf32>
    %341 = arith.addf %328, %340 : vector<16x16xf32>
    %c61 = arith.constant 61 : index
    %342 = memref.load %arg2[%c61] : memref<108xf32, #tpu.memory_space<smem>>
    %343 = vector.broadcast %342 : f32 to vector<16x16xf32>
    %344 = arith.mulf %343, %337 : vector<16x16xf32>
    %345 = arith.addf %332, %344 : vector<16x16xf32>
    %c97 = arith.constant 97 : index
    %346 = memref.load %arg2[%c97] : memref<108xf32, #tpu.memory_space<smem>>
    %347 = vector.broadcast %346 : f32 to vector<16x16xf32>
    %348 = arith.mulf %347, %337 : vector<16x16xf32>
    %349 = arith.addf %336, %348 : vector<16x16xf32>
    %350 = vector.extract_strided_slice %245 {offsets = [2, 2], sizes = [16, 16], strides = [1, 1]} : vector<18x18xf32> to vector<16x16xf32>
    %c26 = arith.constant 26 : index
    %351 = memref.load %arg2[%c26] : memref<108xf32, #tpu.memory_space<smem>>
    %352 = vector.broadcast %351 : f32 to vector<16x16xf32>
    %353 = arith.mulf %352, %350 : vector<16x16xf32>
    %354 = arith.addf %341, %353 : vector<16x16xf32>
    %c62 = arith.constant 62 : index
    %355 = memref.load %arg2[%c62] : memref<108xf32, #tpu.memory_space<smem>>
    %356 = vector.broadcast %355 : f32 to vector<16x16xf32>
    %357 = arith.mulf %356, %350 : vector<16x16xf32>
    %358 = arith.addf %345, %357 : vector<16x16xf32>
    %c98 = arith.constant 98 : index
    %359 = memref.load %arg2[%c98] : memref<108xf32, #tpu.memory_space<smem>>
    %360 = vector.broadcast %359 : f32 to vector<16x16xf32>
    %361 = arith.mulf %360, %350 : vector<16x16xf32>
    %362 = arith.addf %349, %361 : vector<16x16xf32>
    %c0_15 = arith.constant 0 : index
    %c3_16 = arith.constant 3 : index
    %c0_17 = arith.constant 0 : index
    %c0_18 = arith.constant 0 : index
    %363 = vector.load %arg1[%c0_15, %c3_16, %c0_17, %c0_18] : memref<1x4x18x18xf32, #tpu.memory_space<vmem>>, vector<1x1x18x18xf32>
    %364 = vector.shape_cast %363 : vector<1x1x18x18xf32> to vector<18x18xf32>
    %365 = vector.extract_strided_slice %364 {offsets = [0, 0], sizes = [16, 16], strides = [1, 1]} : vector<18x18xf32> to vector<16x16xf32>
    %c27 = arith.constant 27 : index
    %366 = memref.load %arg2[%c27] : memref<108xf32, #tpu.memory_space<smem>>
    %367 = vector.broadcast %366 : f32 to vector<16x16xf32>
    %368 = arith.mulf %367, %365 : vector<16x16xf32>
    %369 = arith.addf %354, %368 : vector<16x16xf32>
    %c63 = arith.constant 63 : index
    %370 = memref.load %arg2[%c63] : memref<108xf32, #tpu.memory_space<smem>>
    %371 = vector.broadcast %370 : f32 to vector<16x16xf32>
    %372 = arith.mulf %371, %365 : vector<16x16xf32>
    %373 = arith.addf %358, %372 : vector<16x16xf32>
    %c99 = arith.constant 99 : index
    %374 = memref.load %arg2[%c99] : memref<108xf32, #tpu.memory_space<smem>>
    %375 = vector.broadcast %374 : f32 to vector<16x16xf32>
    %376 = arith.mulf %375, %365 : vector<16x16xf32>
    %377 = arith.addf %362, %376 : vector<16x16xf32>
    %378 = vector.extract_strided_slice %364 {offsets = [0, 1], sizes = [16, 16], strides = [1, 1]} : vector<18x18xf32> to vector<16x16xf32>
    %c28 = arith.constant 28 : index
    %379 = memref.load %arg2[%c28] : memref<108xf32, #tpu.memory_space<smem>>
    %380 = vector.broadcast %379 : f32 to vector<16x16xf32>
    %381 = arith.mulf %380, %378 : vector<16x16xf32>
    %382 = arith.addf %369, %381 : vector<16x16xf32>
    %c64 = arith.constant 64 : index
    %383 = memref.load %arg2[%c64] : memref<108xf32, #tpu.memory_space<smem>>
    %384 = vector.broadcast %383 : f32 to vector<16x16xf32>
    %385 = arith.mulf %384, %378 : vector<16x16xf32>
    %386 = arith.addf %373, %385 : vector<16x16xf32>
    %c100 = arith.constant 100 : index
    %387 = memref.load %arg2[%c100] : memref<108xf32, #tpu.memory_space<smem>>
    %388 = vector.broadcast %387 : f32 to vector<16x16xf32>
    %389 = arith.mulf %388, %378 : vector<16x16xf32>
    %390 = arith.addf %377, %389 : vector<16x16xf32>
    %391 = vector.extract_strided_slice %364 {offsets = [0, 2], sizes = [16, 16], strides = [1, 1]} : vector<18x18xf32> to vector<16x16xf32>
    %c29 = arith.constant 29 : index
    %392 = memref.load %arg2[%c29] : memref<108xf32, #tpu.memory_space<smem>>
    %393 = vector.broadcast %392 : f32 to vector<16x16xf32>
    %394 = arith.mulf %393, %391 : vector<16x16xf32>
    %395 = arith.addf %382, %394 : vector<16x16xf32>
    %c65 = arith.constant 65 : index
    %396 = memref.load %arg2[%c65] : memref<108xf32, #tpu.memory_space<smem>>
    %397 = vector.broadcast %396 : f32 to vector<16x16xf32>
    %398 = arith.mulf %397, %391 : vector<16x16xf32>
    %399 = arith.addf %386, %398 : vector<16x16xf32>
    %c101 = arith.constant 101 : index
    %400 = memref.load %arg2[%c101] : memref<108xf32, #tpu.memory_space<smem>>
    %401 = vector.broadcast %400 : f32 to vector<16x16xf32>
    %402 = arith.mulf %401, %391 : vector<16x16xf32>
    %403 = arith.addf %390, %402 : vector<16x16xf32>
    %404 = vector.extract_strided_slice %364 {offsets = [1, 0], sizes = [16, 16], strides = [1, 1]} : vector<18x18xf32> to vector<16x16xf32>
    %c30 = arith.constant 30 : index
    %405 = memref.load %arg2[%c30] : memref<108xf32, #tpu.memory_space<smem>>
    %406 = vector.broadcast %405 : f32 to vector<16x16xf32>
    %407 = arith.mulf %406, %404 : vector<16x16xf32>
    %408 = arith.addf %395, %407 : vector<16x16xf32>
    %c66 = arith.constant 66 : index
    %409 = memref.load %arg2[%c66] : memref<108xf32, #tpu.memory_space<smem>>
    %410 = vector.broadcast %409 : f32 to vector<16x16xf32>
    %411 = arith.mulf %410, %404 : vector<16x16xf32>
    %412 = arith.addf %399, %411 : vector<16x16xf32>
    %c102 = arith.constant 102 : index
    %413 = memref.load %arg2[%c102] : memref<108xf32, #tpu.memory_space<smem>>
    %414 = vector.broadcast %413 : f32 to vector<16x16xf32>
    %415 = arith.mulf %414, %404 : vector<16x16xf32>
    %416 = arith.addf %403, %415 : vector<16x16xf32>
    %417 = vector.extract_strided_slice %364 {offsets = [1, 1], sizes = [16, 16], strides = [1, 1]} : vector<18x18xf32> to vector<16x16xf32>
    %c31 = arith.constant 31 : index
    %418 = memref.load %arg2[%c31] : memref<108xf32, #tpu.memory_space<smem>>
    %419 = vector.broadcast %418 : f32 to vector<16x16xf32>
    %420 = arith.mulf %419, %417 : vector<16x16xf32>
    %421 = arith.addf %408, %420 : vector<16x16xf32>
    %c67 = arith.constant 67 : index
    %422 = memref.load %arg2[%c67] : memref<108xf32, #tpu.memory_space<smem>>
    %423 = vector.broadcast %422 : f32 to vector<16x16xf32>
    %424 = arith.mulf %423, %417 : vector<16x16xf32>
    %425 = arith.addf %412, %424 : vector<16x16xf32>
    %c103 = arith.constant 103 : index
    %426 = memref.load %arg2[%c103] : memref<108xf32, #tpu.memory_space<smem>>
    %427 = vector.broadcast %426 : f32 to vector<16x16xf32>
    %428 = arith.mulf %427, %417 : vector<16x16xf32>
    %429 = arith.addf %416, %428 : vector<16x16xf32>
    %430 = vector.extract_strided_slice %364 {offsets = [1, 2], sizes = [16, 16], strides = [1, 1]} : vector<18x18xf32> to vector<16x16xf32>
    %c32 = arith.constant 32 : index
    %431 = memref.load %arg2[%c32] : memref<108xf32, #tpu.memory_space<smem>>
    %432 = vector.broadcast %431 : f32 to vector<16x16xf32>
    %433 = arith.mulf %432, %430 : vector<16x16xf32>
    %434 = arith.addf %421, %433 : vector<16x16xf32>
    %c68 = arith.constant 68 : index
    %435 = memref.load %arg2[%c68] : memref<108xf32, #tpu.memory_space<smem>>
    %436 = vector.broadcast %435 : f32 to vector<16x16xf32>
    %437 = arith.mulf %436, %430 : vector<16x16xf32>
    %438 = arith.addf %425, %437 : vector<16x16xf32>
    %c104 = arith.constant 104 : index
    %439 = memref.load %arg2[%c104] : memref<108xf32, #tpu.memory_space<smem>>
    %440 = vector.broadcast %439 : f32 to vector<16x16xf32>
    %441 = arith.mulf %440, %430 : vector<16x16xf32>
    %442 = arith.addf %429, %441 : vector<16x16xf32>
    %443 = vector.extract_strided_slice %364 {offsets = [2, 0], sizes = [16, 16], strides = [1, 1]} : vector<18x18xf32> to vector<16x16xf32>
    %c33 = arith.constant 33 : index
    %444 = memref.load %arg2[%c33] : memref<108xf32, #tpu.memory_space<smem>>
    %445 = vector.broadcast %444 : f32 to vector<16x16xf32>
    %446 = arith.mulf %445, %443 : vector<16x16xf32>
    %447 = arith.addf %434, %446 : vector<16x16xf32>
    %c69 = arith.constant 69 : index
    %448 = memref.load %arg2[%c69] : memref<108xf32, #tpu.memory_space<smem>>
    %449 = vector.broadcast %448 : f32 to vector<16x16xf32>
    %450 = arith.mulf %449, %443 : vector<16x16xf32>
    %451 = arith.addf %438, %450 : vector<16x16xf32>
    %c105 = arith.constant 105 : index
    %452 = memref.load %arg2[%c105] : memref<108xf32, #tpu.memory_space<smem>>
    %453 = vector.broadcast %452 : f32 to vector<16x16xf32>
    %454 = arith.mulf %453, %443 : vector<16x16xf32>
    %455 = arith.addf %442, %454 : vector<16x16xf32>
    %456 = vector.extract_strided_slice %364 {offsets = [2, 1], sizes = [16, 16], strides = [1, 1]} : vector<18x18xf32> to vector<16x16xf32>
    %c34 = arith.constant 34 : index
    %457 = memref.load %arg2[%c34] : memref<108xf32, #tpu.memory_space<smem>>
    %458 = vector.broadcast %457 : f32 to vector<16x16xf32>
    %459 = arith.mulf %458, %456 : vector<16x16xf32>
    %460 = arith.addf %447, %459 : vector<16x16xf32>
    %c70 = arith.constant 70 : index
    %461 = memref.load %arg2[%c70] : memref<108xf32, #tpu.memory_space<smem>>
    %462 = vector.broadcast %461 : f32 to vector<16x16xf32>
    %463 = arith.mulf %462, %456 : vector<16x16xf32>
    %464 = arith.addf %451, %463 : vector<16x16xf32>
    %c106 = arith.constant 106 : index
    %465 = memref.load %arg2[%c106] : memref<108xf32, #tpu.memory_space<smem>>
    %466 = vector.broadcast %465 : f32 to vector<16x16xf32>
    %467 = arith.mulf %466, %456 : vector<16x16xf32>
    %468 = arith.addf %455, %467 : vector<16x16xf32>
    %469 = vector.extract_strided_slice %364 {offsets = [2, 2], sizes = [16, 16], strides = [1, 1]} : vector<18x18xf32> to vector<16x16xf32>
    %c35 = arith.constant 35 : index
    %470 = memref.load %arg2[%c35] : memref<108xf32, #tpu.memory_space<smem>>
    %471 = vector.broadcast %470 : f32 to vector<16x16xf32>
    %472 = arith.mulf %471, %469 : vector<16x16xf32>
    %473 = arith.addf %460, %472 : vector<16x16xf32>
    %c71 = arith.constant 71 : index
    %474 = memref.load %arg2[%c71] : memref<108xf32, #tpu.memory_space<smem>>
    %475 = vector.broadcast %474 : f32 to vector<16x16xf32>
    %476 = arith.mulf %475, %469 : vector<16x16xf32>
    %477 = arith.addf %464, %476 : vector<16x16xf32>
    %c107 = arith.constant 107 : index
    %478 = memref.load %arg2[%c107] : memref<108xf32, #tpu.memory_space<smem>>
    %479 = vector.broadcast %478 : f32 to vector<16x16xf32>
    %480 = arith.mulf %479, %469 : vector<16x16xf32>
    %481 = arith.addf %468, %480 : vector<16x16xf32>
    %482 = arith.mulf %473, %473 : vector<16x16xf32>
    %483 = arith.mulf %477, %477 : vector<16x16xf32>
    %484 = arith.addf %482, %483 : vector<16x16xf32>
    %485 = arith.mulf %481, %481 : vector<16x16xf32>
    %486 = arith.addf %484, %485 : vector<16x16xf32>
    %cst = arith.constant 1.000000e-24 : f32
    %487 = vector.broadcast %cst : f32 to vector<16x16xf32>
    %488 = arith.maximumf %486, %487 : vector<16x16xf32>
    %489 = math.rsqrt %488 : vector<16x16xf32>
    %490 = arith.mulf %473, %489 : vector<16x16xf32>
    %c0_19 = arith.constant 0 : index
    %c0_20 = arith.constant 0 : index
    %c0_21 = arith.constant 0 : index
    %c0_22 = arith.constant 0 : index
    %491 = vector.load %arg4[%c0_19, %c0_20, %c0_21, %c0_22] : memref<1x3x16x16xf32, #tpu.memory_space<vmem>>, vector<1x1x16x16xf32>
    %492 = vector.shape_cast %491 : vector<1x1x16x16xf32> to vector<16x16xf32>
    %493 = vector.shape_cast %490 : vector<16x16xf32> to vector<1x1x16x16xf32>
    tpu.vector_store %arg4[%c0_19, %c0_20, %c0_21, %c0_22], %493 {strides = array<i32>} : memref<1x3x16x16xf32, #tpu.memory_space<vmem>>, vector<1x1x16x16xf32>,
    %494 = arith.mulf %477, %489 : vector<16x16xf32>
    %c0_23 = arith.constant 0 : index
    %c1_24 = arith.constant 1 : index
    %c0_25 = arith.constant 0 : index
    %c0_26 = arith.constant 0 : index
    %495 = vector.load %arg4[%c0_23, %c1_24, %c0_25, %c0_26] : memref<1x3x16x16xf32, #tpu.memory_space<vmem>>, vector<1x1x16x16xf32>
    %496 = vector.shape_cast %495 : vector<1x1x16x16xf32> to vector<16x16xf32>
    %497 = vector.shape_cast %494 : vector<16x16xf32> to vector<1x1x16x16xf32>
    tpu.vector_store %arg4[%c0_23, %c1_24, %c0_25, %c0_26], %497 {strides = array<i32>} : memref<1x3x16x16xf32, #tpu.memory_space<vmem>>, vector<1x1x16x16xf32>,
    %498 = arith.mulf %481, %489 : vector<16x16xf32>
    %c0_27 = arith.constant 0 : index
    %c2_28 = arith.constant 2 : index
    %c0_29 = arith.constant 0 : index
    %c0_30 = arith.constant 0 : index
    %499 = vector.load %arg4[%c0_27, %c2_28, %c0_29, %c0_30] : memref<1x3x16x16xf32, #tpu.memory_space<vmem>>, vector<1x1x16x16xf32>
    %500 = vector.shape_cast %499 : vector<1x1x16x16xf32> to vector<16x16xf32>
    %501 = vector.shape_cast %498 : vector<16x16xf32> to vector<1x1x16x16xf32>
    tpu.vector_store %arg4[%c0_27, %c2_28, %c0_29, %c0_30], %501 {strides = array<i32>} : memref<1x3x16x16xf32, #tpu.memory_space<vmem>>, vector<1x1x16x16xf32>,
    return
  }
  func.func @transform_0(%arg0: i32) -> (i32, i32, i32, i32) {
    %c0_i32 = arith.constant 0 : i32
    %c0_i32_0 = arith.constant 0 : i32
    %c0_i32_1 = arith.constant 0 : i32
    %c0_i32_2 = arith.constant 0 : i32
    return %arg0, %c0_i32, %c0_i32_0, %c0_i32_1 : i32, i32, i32, i32
  }
  func.func @transform_1(%arg0: i32) -> i32 {
    %c0_i32 = arith.constant 0 : i32
    %c0_i32_0 = arith.constant 0 : i32
    return %c0_i32 : i32
  }
  func.func @transform_2(%arg0: i32) -> i32 {
    %c0_i32 = arith.constant 0 : i32
    %c0_i32_0 = arith.constant 0 : i32
    return %c0_i32 : i32
  }
  func.func @transform_3(%arg0: i32) -> (i32, i32, i32, i32) {
    %c0_i32 = arith.constant 0 : i32
    %c0_i32_0 = arith.constant 0 : i32
    %c0_i32_1 = arith.constant 0 : i32
    %c0_i32_2 = arith.constant 0 : i32
    return %arg0, %c0_i32, %c0_i32_0, %c0_i32_1 : i32, i32, i32, i32
  }
}

</mosaic_0001>

<llo_original>
// kernel: tpu_custom_call.1
$region0: #{tpu_custom_call.1}
  #allocation0 [shape = 'u32[]', space=smem, size = 0x4, offset = 0x4, fixed_abs, tag = 'smem constant byte address 0x4 - core index']
  #allocation1 [shape = 'u32[72,128]{1,0:T(1,128)}', space=vmem, size = 0x9000, scoped, tag = 'internal scratch']
  %s0 = inlined_call_operand.vmem [shape: f32[2,4,18,18], index: 0, kind: input, shape index: {}]
  %s1 = inlined_call_operand.vmem [shape: f32[108], index: 1, kind: input, shape index: {}]
  %s2 = inlined_call_operand.vmem [shape: f32[3], index: 2, kind: input, shape index: {}]
  %s3 = inlined_call_operand.hbm [shape: f32[2,3,16,16], index: 3, kind: output, shape index: {}]
  %s4 = sld [smem:[#allocation0]]
  $region53: #{tpu_custom_call.1} parent=0
    _
  %s6 = ssub.s32 1, %s4
  %s7 = scalar_select 0, %s6, %s4
  $region1: #{tpu_custom_call.1} parent=0
    #allocation2 [shape = 'u8[512]{0}', space=smem, size = 0x200, scoped, tag = 'input window, operand 1, single buffered']
    #allocation3 [shape = 's32[2]{0}', space=sflag, size = 0x8, scoped, tag = 'scoped memory for tpu_custom_call.1']
    #allocation4 [shape = 's32[2]{0}', space=sflag, size = 0x8, scoped, tag = 'scoped memory for tpu_custom_call.1']
    #allocation5 [shape = 'u8[512]{0}', space=smem, size = 0x200, scoped, tag = 'input window, operand 2, single buffered']
    #allocation6 [shape = 's32[1]{0}', space=sflag, size = 0x4, scoped, tag = 'scoped memory for tpu_custom_call.1']
    #allocation7 [shape = 'u8[49152]{0}', space=vmem, size = 0xc000, scoped, tag = 'output window, operand 0']
    %8 = vsyncpa [#allocation4], 0
    %9 = vsyncpa [#allocation6], 0
    %10 = vsyncpa [#allocation3], 0
    %s11 = scalar_lea.sflag [#allocation3], 1
    %12 = vsyncpa %s11, 0
    loop: start=0, step=1, limit=4
    $region2: #{tpu_custom_call.1} parent=1 // loop_pre_header
      _
    $region3: #{tpu_custom_call.1} parent=1 // loop_header
      %s14 = sphi 0, %s18
      %p15 = scmp.ge.s32.totalorder %s14, 4
      %s24 = sphi 0, %s26
      %s27 = sphi 0, %s24
      %s28 = sphi 0, %s27
      %s44 = sphi 0, %s28
      %s48 = sphi 0, %s48
      %s50 = sphi 0, %s48
      %s51 = sphi 0, %s50
      %s65 = sphi 0, %s51
      %s69 = sphi 0, %s69
      %s71 = sphi 0, %s69
      %s72 = sphi 0, %s71
      %s86 = sphi 0, %s72
      %s92 = sphi 0, %s94
      %s95 = sphi 0, %s92
      %s96 = sphi 0, %s95
      %s112 = sphi 0, %s96
    $region4: #{tpu_custom_call.1} parent=1 // loop_header_branch
      %17 = sbr.rel (%p15) target = $region8
    $region5: #{tpu_custom_call.1} parent=1 // loop_body
      %s19 = ssub.s32 %s14, 1
      %s20 = ssub.s32 %s14, 2
      %s21 = sadd.s32 %s14, 1
      %s22 = ssub.s32 %s14, %s21
      %p23 = scmp.eq.s32.totalorder %s22, 0
      %s25 = sadd.s32 %s24, 1
      %s26 = scalar_select %p23, %s24, %s25
      %p29 = pneg %p23
      %p30 = scmp.eq.s32.totalorder %s14, 1
      %p31 = por %p29, %p30
      %p32 = scmp.ne.s32.totalorder %s24, %s27
      %p33 = scmp.eq.s32.totalorder %s14, 0
      %p34 = por %p32, %p33
      %p35 = scmp.ne.s32.totalorder %s24, %s27
      %p36 = scmp.eq.s32.totalorder %s19, 1
      %p37 = por %p35, %p36
      %p38 = scmp.ne.s32.totalorder %s27, %s28
      %p39 = scmp.eq.s32.totalorder %s19, 0
      %p40 = por %p38, %p39
      %p41 = scmp.ne.s32.totalorder %s27, %s28
      %p42 = scmp.eq.s32.totalorder %s20, 1
      %p43 = por %p41, %p42
      %p45 = scmp.ne.s32.totalorder %s28, %s44
      %p46 = scmp.eq.s32.totalorder %s20, 0
      %p47 = por %p45, %p46
      %s49 = sadd.s32 %s48, 1
      %p52 = scmp.eq.s32.totalorder %s14, 1
      %p53 = scmp.ne.s32.totalorder %s48, %s50
      %p54 = scmp.eq.s32.totalorder %s14, 0
      %p55 = por %p53, %p54
      %p56 = scmp.ne.s32.totalorder %s48, %s50
      %p57 = scmp.eq.s32.totalorder %s19, 1
      %p58 = por %p56, %p57
      %p59 = scmp.ne.s32.totalorder %s50, %s51
      %p60 = scmp.eq.s32.totalorder %s19, 0
      %p61 = por %p59, %p60
      %p62 = scmp.ne.s32.totalorder %s50, %s51
      %p63 = scmp.eq.s32.totalorder %s20, 1
      %p64 = por %p62, %p63
      %p66 = scmp.ne.s32.totalorder %s51, %s65
      %p67 = scmp.eq.s32.totalorder %s20, 0
      %p68 = por %p66, %p67
      %s70 = sadd.s32 %s69, 1
      %p73 = scmp.eq.s32.totalorder %s14, 1
      %p74 = scmp.ne.s32.totalorder %s69, %s71
      %p75 = scmp.eq.s32.totalorder %s14, 0
      %p76 = por %p74, %p75
      %p77 = scmp.ne.s32.totalorder %s69, %s71
      %p78 = scmp.eq.s32.totalorder %s19, 1
      %p79 = por %p77, %p78
      %p80 = scmp.ne.s32.totalorder %s71, %s72
      %p81 = scmp.eq.s32.totalorder %s19, 0
      %p82 = por %p80, %p81
      %p83 = scmp.ne.s32.totalorder %s71, %s72
      %p84 = scmp.eq.s32.totalorder %s20, 1
      %p85 = por %p83, %p84
      %p87 = scmp.ne.s32.totalorder %s72, %s86
      %p88 = scmp.eq.s32.totalorder %s20, 0
      %p89 = por %p87, %p88
      %s90 = ssub.s32 %s14, %s21
      %p91 = scmp.eq.s32.totalorder %s90, 0
      %s93 = sadd.s32 %s92, 1
      %s94 = scalar_select %p91, %s92, %s93
      %p97 = pneg %p91
      %p98 = scmp.eq.s32.totalorder %s14, 1
      %p99 = por %p97, %p98
      %p100 = scmp.ne.s32.totalorder %s92, %s95
      %p101 = scmp.eq.s32.totalorder %s14, 0
      %p102 = por %p100, %p101
      %p103 = scmp.ne.s32.totalorder %s92, %s95
      %p104 = scmp.eq.s32.totalorder %s19, 1
      %p105 = por %p103, %p104
      %p106 = scmp.ne.s32.totalorder %s95, %s96
      %p107 = scmp.eq.s32.totalorder %s19, 0
      %p108 = por %p106, %p107
      %p109 = scmp.ne.s32.totalorder %s95, %s96
      %p110 = scmp.eq.s32.totalorder %s20, 1
      %p111 = por %p109, %p110
      %p113 = scmp.ne.s32.totalorder %s96, %s112
      %p114 = scmp.eq.s32.totalorder %s20, 0
      %p115 = por %p113, %p114
      %p116 = scmp.le.s32.totalorder 1, %s14
      %p117 = scmp.lt.s32.totalorder %s14, 3
      %p118 = pnand %p116, %p117
      %p119 = pneg %p118
      // Predicated region
      $region9: #{tpu_custom_call.1} parent=5 // pred_check
        _
      $region10: #{tpu_custom_call.1} parent=5 // pred_check_branch
        %121 = sbr.rel (%p118) target = $region12
      $region11: #{tpu_custom_call.1} parent=5 // pred_region
        %s122 = ssub.s32 %s14, 1
        // Predicated region
        $region13: #{tpu_custom_call.1} parent=11 // pred_check
          %p123 = pneg %p61
        $region14: #{tpu_custom_call.1} parent=11 // pred_check_branch
          %125 = sbr.rel (%p123) target = $region16
        $region15: #{tpu_custom_call.1} parent=11 // pred_region
          %127 = vsyncadd [#allocation4], 0
          %s129 = sshll.u32 %s1, 4
          %s130 = int_to_ptr.vmem [resolvable:$true] %s129
          %132 = dma.vmem_to_smem %s130, 16, [#allocation2], [#allocation4]
        $region16: #{tpu_custom_call.1} parent=11 // pred_fallthru
          _
        // Predicated region
        $region17: #{tpu_custom_call.1} parent=11 // pred_check
          %p133 = pneg %p82
        $region18: #{tpu_custom_call.1} parent=11 // pred_check_branch
          %135 = sbr.rel (%p133) target = $region20
        $region19: #{tpu_custom_call.1} parent=11 // pred_region
          %137 = vsyncadd [#allocation6], 0
          %s139 = sshll.u32 %s2, 4
          %s140 = int_to_ptr.vmem [resolvable:$true] %s139
          %142 = dma.vmem_to_smem %s140, 16, [#allocation5], [#allocation6]
        $region20: #{tpu_custom_call.1} parent=11 // pred_fallthru
          _
      $region12: #{tpu_custom_call.1} parent=5 // pred_fallthru
        _
      %p143 = scmp.lt.s32.totalorder %s14, 2
      // Predicated region
      $region21: #{tpu_custom_call.1} parent=5 // pred_check
        %p144 = pneg %p143
      $region22: #{tpu_custom_call.1} parent=5 // pred_check_branch
        %146 = sbr.rel (%p144) target = $region24
      $region23: #{tpu_custom_call.1} parent=5 // pred_region
        // Predicated region
        $region25: #{tpu_custom_call.1} parent=23 // pred_check
          %p147 = pneg %p34
        $region26: #{tpu_custom_call.1} parent=23 // pred_check_branch
          %149 = sbr.rel (%p147) target = $region28
        $region27: #{tpu_custom_call.1} parent=23 // pred_region
          %p150 = scmp.lt.s32.totalorder %s14, 1
          %s151 = scalar_select %p150, %s14, 1
          %s152 = smul.addr %s151, 12
          %s153 = smul.addr %s152, 8
          %s154 = scalar_lea.vmem %s0, %s153
        $region28: #{tpu_custom_call.1} parent=23 // pred_fallthru
          _
      $region24: #{tpu_custom_call.1} parent=5 // pred_fallthru
        _
      %p155 = scmp.le.s32.totalorder 1, %s14
      %p156 = scmp.lt.s32.totalorder %s14, 3
      %p157 = pnand %p155, %p156
      %p158 = pneg %p157
      // Predicated region
      $region29: #{tpu_custom_call.1} parent=5 // pred_check
        _
      $region30: #{tpu_custom_call.1} parent=5 // pred_check_branch
        %160 = sbr.rel (%p157) target = $region32
      $region31: #{tpu_custom_call.1} parent=5 // pred_region
        %s161 = ssub.s32 %s14, 1
        // Predicated region
        $region33: #{tpu_custom_call.1} parent=31 // pred_check
          %p162 = pneg %p61
        $region34: #{tpu_custom_call.1} parent=31 // pred_check_branch
          %164 = sbr.rel (%p162) target = $region36
        $region35: #{tpu_custom_call.1} parent=31 // pred_region
          %166 = dma.done [#allocation4], 16
        $region36: #{tpu_custom_call.1} parent=31 // pred_fallthru
          _
        // Predicated region
        $region37: #{tpu_custom_call.1} parent=31 // pred_check
          %p167 = pneg %p82
        $region38: #{tpu_custom_call.1} parent=31 // pred_check_branch
          %169 = sbr.rel (%p167) target = $region40
        $region39: #{tpu_custom_call.1} parent=31 // pred_region
          %171 = dma.done [#allocation6], 16
        $region40: #{tpu_custom_call.1} parent=31 // pred_fallthru
          _
        %172 = sfence
        %p173 = scmp.lt.s32.totalorder %s19, 1
        %s174 = scalar_select %p173, %s19, 1
        %s175 = smul.addr %s174, 12
        %s176 = smul.addr %s175, 8
        %s177 = scalar_lea.vmem %s0, %s176
        %p178 = pneg %p40
        %p179 = pneg %p37
        %p180 = pneg %p61
        %p181 = pneg %p58
        %p182 = pneg %p82
        %p183 = pneg %p79
        %p184 = pneg %p108
        %p185 = pneg %p105
        %s186 = sand.u32 %s95, 1
        %s187 = scalar_lea.sflag [#allocation3], %s186
        %s188 = sand.u32 %s95, 1
        %s189 = smul.addr %s188, 48
        %s190 = scalar_lea.vmem [#allocation7], %s189
        %p191 = scmp.lt.s32.totalorder %s19, 1
        %s192 = scalar_select %p191, %s19, 1
        %s193 = smul.addr %s192, 12
        %s194 = smul.addr %s193, 8
        %s195 = scalar_lea.vmem %s0, %s194
        %s196 = sld [smem:[#allocation5]]
        %v197 = vstv %s196
        %s198 = sld [smem:[#allocation5 + $0x1]]
        %v199 = vstv %s198
        %s200 = sld [smem:[#allocation5 + $0x2]]
        %v201 = vstv %s200
        %v202 = vld [vmem:[%s195] sm:$0xff]
        %v203 = vld [vmem:[%s195 + $0x8] sm:$0xff]
        %v204 = vld [vmem:[%s195 + $0x10] sm:$0x3]
        %s205 = sld [smem:[#allocation2]]
        %v206 = vstv %s205
        %v207 = vmul.f32 %v206, %v202
        %v208 = vmul.f32 %v206, %v203
        %v209 = vadd.f32 %v197, %v207
        %v210 = vadd.f32 %v197, %v208
        %s211 = sld [smem:[#allocation2 + $0x24]]
        %v212 = vstv %s211
        %v213 = vmul.f32 %v212, %v202
        %v214 = vmul.f32 %v212, %v203
        %v215 = vadd.f32 %v199, %v213
        %v216 = vadd.f32 %v199, %v214
        %s217 = sld [smem:[#allocation2 + $0x48]]
        %v218 = vstv %s217
        %v219 = vmul.f32 %v218, %v202
        %v220 = vmul.f32 %v218, %v203
        %v221 = vadd.f32 %v201, %v219
        %v222 = vadd.f32 %v201, %v220
        %s223 = sld [smem:[#allocation2 + $0x1]]
        %v224 = vstv %s223
        %v225 = vmul.f32 %v224, %v202
        %v226 = vmul.f32 %v224, %v203
        %229 = vrot.lane.b32.xlu0 %v225, 127
        %v230 = vpop.permute.xlu0 %229
        %231 = vrot.lane.b32.xlu0 %v226, 127
        %v232 = vpop.permute.xlu0 %231
        %v235 = vadd.f32 %v209, %v230
        %v236 = vadd.f32 %v210, %v232
        %s237 = sld [smem:[#allocation2 + $0x25]]
        %v238 = vstv %s237
        %v239 = vmul.f32 %v238, %v202
        %v240 = vmul.f32 %v238, %v203
        %243 = vrot.lane.b32.xlu0 %v239, 127
        %v244 = vpop.permute.xlu0 %243
        %245 = vrot.lane.b32.xlu0 %v240, 127
        %v246 = vpop.permute.xlu0 %245
        %v249 = vadd.f32 %v215, %v244
        %v250 = vadd.f32 %v216, %v246
        %s251 = sld [smem:[#allocation2 + $0x49]]
        %v252 = vstv %s251
        %v253 = vmul.f32 %v252, %v202
        %v254 = vmul.f32 %v252, %v203
        %257 = vrot.lane.b32.xlu0 %v253, 127
        %v258 = vpop.permute.xlu0 %257
        %259 = vrot.lane.b32.xlu0 %v254, 127
        %v260 = vpop.permute.xlu0 %259
        %v263 = vadd.f32 %v221, %v258
        %v264 = vadd.f32 %v222, %v260
        %s265 = sld [smem:[#allocation2 + $0x2]]
        %v266 = vstv %s265
        %v267 = vmul.f32 %v266, %v202
        %v268 = vmul.f32 %v266, %v203
        %271 = vrot.lane.b32.xlu0 %v267, 126
        %v272 = vpop.permute.xlu0 %271
        %273 = vrot.lane.b32.xlu0 %v268, 126
        %v274 = vpop.permute.xlu0 %273
        %v277 = vadd.f32 %v235, %v272
        %v278 = vadd.f32 %v236, %v274
        %s279 = sld [smem:[#allocation2 + $0x26]]
        %v280 = vstv %s279
        %v281 = vmul.f32 %v280, %v202
        %v282 = vmul.f32 %v280, %v203
        %285 = vrot.lane.b32.xlu0 %v281, 126
        %v286 = vpop.permute.xlu0 %285
        %287 = vrot.lane.b32.xlu0 %v282, 126
        %v288 = vpop.permute.xlu0 %287
        %v291 = vadd.f32 %v249, %v286
        %v292 = vadd.f32 %v250, %v288
        %s293 = sld [smem:[#allocation2 + $0x4a]]
        %v294 = vstv %s293
        %v295 = vmul.f32 %v294, %v202
        %v296 = vmul.f32 %v294, %v203
        %299 = vrot.lane.b32.xlu0 %v295, 126
        %v300 = vpop.permute.xlu0 %299
        %301 = vrot.lane.b32.xlu0 %v296, 126
        %v302 = vpop.permute.xlu0 %301
        %v305 = vadd.f32 %v263, %v300
        %v306 = vadd.f32 %v264, %v302
        %s307 = sld [smem:[#allocation2 + $0x3]]
        %v308 = vstv %s307
        %v309 = vmul.f32 %v308, %v202
        %v310 = vmul.f32 %v308, %v203
        %v311 = vmul.f32 %v308, %v204
        %vm315 = vcmask 1046528
        %v316 = vrot.slane %v309, 1
        %v317 = vrot.slane %v310, 1
        %v318 = vsel %vm315, %v316, %v317
        %v319 = vrot.slane %v311, 1
        %v320 = vsel %vm315, %v317, %v319
        %v323 = vadd.f32 %v277, %v318
        %v324 = vadd.f32 %v278, %v320
        %s325 = sld [smem:[#allocation2 + $0x27]]
        %v326 = vstv %s325
        %v327 = vmul.f32 %v326, %v202
        %v328 = vmul.f32 %v326, %v203
        %v329 = vmul.f32 %v326, %v204
        %v333 = vrot.slane %v327, 1
        %v334 = vrot.slane %v328, 1
        %v335 = vsel %vm315, %v333, %v334
        %v336 = vrot.slane %v329, 1
        %v337 = vsel %vm315, %v334, %v336
        %v340 = vadd.f32 %v291, %v335
        %v341 = vadd.f32 %v292, %v337
        %s342 = sld [smem:[#allocation2 + $0x4b]]
        %v343 = vstv %s342
        %v344 = vmul.f32 %v343, %v202
        %v345 = vmul.f32 %v343, %v203
        %v346 = vmul.f32 %v343, %v204
        %v350 = vrot.slane %v344, 1
        %v351 = vrot.slane %v345, 1
        %v352 = vsel %vm315, %v350, %v351
        %v353 = vrot.slane %v346, 1
        %v354 = vsel %vm315, %v351, %v353
        %v357 = vadd.f32 %v305, %v352
        %v358 = vadd.f32 %v306, %v354
        %s359 = sld [smem:[#allocation2 + $0x4]]
        %v360 = vstv %s359
        %v361 = vmul.f32 %v360, %v202
        %v362 = vmul.f32 %v360, %v203
        %v363 = vmul.f32 %v360, %v204
        %v367 = vrot.slane %v361, 1
        %v368 = vrot.slane %v362, 1
        %v369 = vsel %vm315, %v367, %v368
        %v370 = vrot.slane %v363, 1
        %v371 = vsel %vm315, %v368, %v370
        %372 = vrot.lane.b32.xlu0 %v369, 127
        %v373 = vpop.permute.xlu0 %372
        %374 = vrot.lane.b32.xlu0 %v371, 127
        %v375 = vpop.permute.xlu0 %374
        %v378 = vadd.f32 %v323, %v373
        %v379 = vadd.f32 %v324, %v375
        %s380 = sld [smem:[#allocation2 + $0x28]]
        %v381 = vstv %s380
        %v382 = vmul.f32 %v381, %v202
        %v383 = vmul.f32 %v381, %v203
        %v384 = vmul.f32 %v381, %v204
        %v388 = vrot.slane %v382, 1
        %v389 = vrot.slane %v383, 1
        %v390 = vsel %vm315, %v388, %v389
        %v391 = vrot.slane %v384, 1
        %v392 = vsel %vm315, %v389, %v391
        %393 = vrot.lane.b32.xlu0 %v390, 127
        %v394 = vpop.permute.xlu0 %393
        %395 = vrot.lane.b32.xlu0 %v392, 127
        %v396 = vpop.permute.xlu0 %395
        %v399 = vadd.f32 %v340, %v394
        %v400 = vadd.f32 %v341, %v396
        %s401 = sld [smem:[#allocation2 + $0x4c]]
        %v402 = vstv %s401
        %v403 = vmul.f32 %v402, %v202
        %v404 = vmul.f32 %v402, %v203
        %v405 = vmul.f32 %v402, %v204
        %v409 = vrot.slane %v403, 1
        %v410 = vrot.slane %v404, 1
        %v411 = vsel %vm315, %v409, %v410
        %v412 = vrot.slane %v405, 1
        %v413 = vsel %vm315, %v410, %v412
        %414 = vrot.lane.b32.xlu0 %v411, 127
        %v415 = vpop.permute.xlu0 %414
        %416 = vrot.lane.b32.xlu0 %v413, 127
        %v417 = vpop.permute.xlu0 %416
        %v420 = vadd.f32 %v357, %v415
        %v421 = vadd.f32 %v358, %v417
        %s422 = sld [smem:[#allocation2 + $0x5]]
        %v423 = vstv %s422
        %v424 = vmul.f32 %v423, %v202
        %v425 = vmul.f32 %v423, %v203
        %v426 = vmul.f32 %v423, %v204
        %v430 = vrot.slane %v424, 1
        %v431 = vrot.slane %v425, 1
        %v432 = vsel %vm315, %v430, %v431
        %v433 = vrot.slane %v426, 1
        %v434 = vsel %vm315, %v431, %v433
        %435 = vrot.lane.b32.xlu0 %v432, 126
        %v436 = vpop.permute.xlu0 %435
        %437 = vrot.lane.b32.xlu0 %v434, 126
        %v438 = vpop.permute.xlu0 %437
        %v441 = vadd.f32 %v378, %v436
        %v442 = vadd.f32 %v379, %v438
        %s443 = sld [smem:[#allocation2 + $0x29]]
        %v444 = vstv %s443
        %v445 = vmul.f32 %v444, %v202
        %v446 = vmul.f32 %v444, %v203
        %v447 = vmul.f32 %v444, %v204
        %v451 = vrot.slane %v445, 1
        %v452 = vrot.slane %v446, 1
        %v453 = vsel %vm315, %v451, %v452
        %v454 = vrot.slane %v447, 1
        %v455 = vsel %vm315, %v452, %v454
        %456 = vrot.lane.b32.xlu0 %v453, 126
        %v457 = vpop.permute.xlu0 %456
        %458 = vrot.lane.b32.xlu0 %v455, 126
        %v459 = vpop.permute.xlu0 %458
        %v462 = vadd.f32 %v399, %v457
        %v463 = vadd.f32 %v400, %v459
        %s464 = sld [smem:[#allocation2 + $0x4d]]
        %v465 = vstv %s464
        %v466 = vmul.f32 %v465, %v202
        %v467 = vmul.f32 %v465, %v203
        %v468 = vmul.f32 %v465, %v204
        %v472 = vrot.slane %v466, 1
        %v473 = vrot.slane %v467, 1
        %v474 = vsel %vm315, %v472, %v473
        %v475 = vrot.slane %v468, 1
        %v476 = vsel %vm315, %v473, %v475
        %477 = vrot.lane.b32.xlu0 %v474, 126
        %v478 = vpop.permute.xlu0 %477
        %479 = vrot.lane.b32.xlu0 %v476, 126
        %v480 = vpop.permute.xlu0 %479
        %v483 = vadd.f32 %v420, %v478
        %v484 = vadd.f32 %v421, %v480
        %s485 = sld [smem:[#allocation2 + $0x6]]
        %v486 = vstv %s485
        %v487 = vmul.f32 %v486, %v202
        %v488 = vmul.f32 %v486, %v203
        %v489 = vmul.f32 %v486, %v204
        %vm493 = vcmask 1045504
        %v494 = vrot.slane %v487, 2
        %v495 = vrot.slane %v488, 2
        %v496 = vsel %vm493, %v494, %v495
        %v497 = vrot.slane %v489, 2
        %v498 = vsel %vm493, %v495, %v497
        %v501 = vadd.f32 %v441, %v496
        %v502 = vadd.f32 %v442, %v498
        %s503 = sld [smem:[#allocation2 + $0x2a]]
        %v504 = vstv %s503
        %v505 = vmul.f32 %v504, %v202
        %v506 = vmul.f32 %v504, %v203
        %v507 = vmul.f32 %v504, %v204
        %v511 = vrot.slane %v505, 2
        %v512 = vrot.slane %v506, 2
        %v513 = vsel %vm493, %v511, %v512
        %v514 = vrot.slane %v507, 2
        %v515 = vsel %vm493, %v512, %v514
        %v518 = vadd.f32 %v462, %v513
        %v519 = vadd.f32 %v463, %v515
        %s520 = sld [smem:[#allocation2 + $0x4e]]
        %v521 = vstv %s520
        %v522 = vmul.f32 %v521, %v202
        %v523 = vmul.f32 %v521, %v203
        %v524 = vmul.f32 %v521, %v204
        %v528 = vrot.slane %v522, 2
        %v529 = vrot.slane %v523, 2
        %v530 = vsel %vm493, %v528, %v529
        %v531 = vrot.slane %v524, 2
        %v532 = vsel %vm493, %v529, %v531
        %v535 = vadd.f32 %v483, %v530
        %v536 = vadd.f32 %v484, %v532
        %s537 = sld [smem:[#allocation2 + $0x7]]
        %v538 = vstv %s537
        %v539 = vmul.f32 %v538, %v202
        %v540 = vmul.f32 %v538, %v203
        %v541 = vmul.f32 %v538, %v204
        %v545 = vrot.slane %v539, 2
        %v546 = vrot.slane %v540, 2
        %v547 = vsel %vm493, %v545, %v546
        %v548 = vrot.slane %v541, 2
        %v549 = vsel %vm493, %v546, %v548
        %550 = vrot.lane.b32.xlu0 %v547, 127
        %v551 = vpop.permute.xlu0 %550
        %552 = vrot.lane.b32.xlu0 %v549, 127
        %v553 = vpop.permute.xlu0 %552
        %v556 = vadd.f32 %v501, %v551
        %v557 = vadd.f32 %v502, %v553
        %s558 = sld [smem:[#allocation2 + $0x2b]]
        %v559 = vstv %s558
        %v560 = vmul.f32 %v559, %v202
        %v561 = vmul.f32 %v559, %v203
        %v562 = vmul.f32 %v559, %v204
        %v566 = vrot.slane %v560, 2
        %v567 = vrot.slane %v561, 2
        %v568 = vsel %vm493, %v566, %v567
        %v569 = vrot.slane %v562, 2
        %v570 = vsel %vm493, %v567, %v569
        %571 = vrot.lane.b32.xlu0 %v568, 127
        %v572 = vpop.permute.xlu0 %571
        %573 = vrot.lane.b32.xlu0 %v570, 127
        %v574 = vpop.permute.xlu0 %573
        %v577 = vadd.f32 %v518, %v572
        %v578 = vadd.f32 %v519, %v574
        %s579 = sld [smem:[#allocation2 + $0x4f]]
        %v580 = vstv %s579
        %v581 = vmul.f32 %v580, %v202
        %v582 = vmul.f32 %v580, %v203
        %v583 = vmul.f32 %v580, %v204
        %v587 = vrot.slane %v581, 2
        %v588 = vrot.slane %v582, 2
        %v589 = vsel %vm493, %v587, %v588
        %v590 = vrot.slane %v583, 2
        %v591 = vsel %vm493, %v588, %v590
        %592 = vrot.lane.b32.xlu0 %v589, 127
        %v593 = vpop.permute.xlu0 %592
        %594 = vrot.lane.b32.xlu0 %v591, 127
        %v595 = vpop.permute.xlu0 %594
        %v598 = vadd.f32 %v535, %v593
        %v599 = vadd.f32 %v536, %v595
        %s600 = sld [smem:[#allocation2 + $0x8]]
        %v601 = vstv %s600
        %v602 = vmul.f32 %v601, %v202
        %v603 = vmul.f32 %v601, %v203
        %v604 = vmul.f32 %v601, %v204
        %v608 = vrot.slane %v602, 2
        %v609 = vrot.slane %v603, 2
        %v610 = vsel %vm493, %v608, %v609
        %v611 = vrot.slane %v604, 2
        %v612 = vsel %vm493, %v609, %v611
        %613 = vrot.lane.b32.xlu0 %v610, 126
        %v614 = vpop.permute.xlu0 %613
        %615 = vrot.lane.b32.xlu0 %v612, 126
        %v616 = vpop.permute.xlu0 %615
        %v619 = vadd.f32 %v556, %v614
        %v620 = vadd.f32 %v557, %v616
        %s621 = sld [smem:[#allocation2 + $0x2c]]
        %v622 = vstv %s621
        %v623 = vmul.f32 %v622, %v202
        %v624 = vmul.f32 %v622, %v203
        %v625 = vmul.f32 %v622, %v204
        %v629 = vrot.slane %v623, 2
        %v630 = vrot.slane %v624, 2
        %v631 = vsel %vm493, %v629, %v630
        %v632 = vrot.slane %v625, 2
        %v633 = vsel %vm493, %v630, %v632
        %634 = vrot.lane.b32.xlu0 %v631, 126
        %v635 = vpop.permute.xlu0 %634
        %636 = vrot.lane.b32.xlu0 %v633, 126
        %v637 = vpop.permute.xlu0 %636
        %v640 = vadd.f32 %v577, %v635
        %v641 = vadd.f32 %v578, %v637
        %s642 = sld [smem:[#allocation2 + $0x50]]
        %v643 = vstv %s642
        %v644 = vmul.f32 %v643, %v202
        %v645 = vmul.f32 %v643, %v203
        %v646 = vmul.f32 %v643, %v204
        %v650 = vrot.slane %v644, 2
        %v651 = vrot.slane %v645, 2
        %v652 = vsel %vm493, %v650, %v651
        %v653 = vrot.slane %v646, 2
        %v654 = vsel %vm493, %v651, %v653
        %655 = vrot.lane.b32.xlu0 %v652, 126
        %v656 = vpop.permute.xlu0 %655
        %657 = vrot.lane.b32.xlu0 %v654, 126
        %v658 = vpop.permute.xlu0 %657
        %v661 = vadd.f32 %v598, %v656
        %v662 = vadd.f32 %v599, %v658
        %s663 = scalar_lea.vmem %s195, 24
        %v664 = vld [vmem:[%s663] sm:$0xff]
        %v665 = vld [vmem:[%s663 + $0x8] sm:$0xff]
        %v666 = vld [vmem:[%s663 + $0x10] sm:$0x3]
        %s667 = sld [smem:[#allocation2 + $0x9]]
        %v668 = vstv %s667
        %v669 = vmul.f32 %v668, %v664
        %v670 = vmul.f32 %v668, %v665
        %v671 = vadd.f32 %v619, %v669
        %v672 = vadd.f32 %v620, %v670
        %s673 = sld [smem:[#allocation2 + $0x2d]]
        %v674 = vstv %s673
        %v675 = vmul.f32 %v674, %v664
        %v676 = vmul.f32 %v674, %v665
        %v677 = vadd.f32 %v640, %v675
        %v678 = vadd.f32 %v641, %v676
        %s679 = sld [smem:[#allocation2 + $0x51]]
        %v680 = vstv %s679
        %v681 = vmul.f32 %v680, %v664
        %v682 = vmul.f32 %v680, %v665
        %v683 = vadd.f32 %v661, %v681
        %v684 = vadd.f32 %v662, %v682
        %s685 = sld [smem:[#allocation2 + $0xa]]
        %v686 = vstv %s685
        %v687 = vmul.f32 %v686, %v664
        %v688 = vmul.f32 %v686, %v665
        %691 = vrot.lane.b32.xlu0 %v687, 127
        %v692 = vpop.permute.xlu0 %691
        %693 = vrot.lane.b32.xlu0 %v688, 127
        %v694 = vpop.permute.xlu0 %693
        %v697 = vadd.f32 %v671, %v692
        %v698 = vadd.f32 %v672, %v694
        %s699 = sld [smem:[#allocation2 + $0x2e]]
        %v700 = vstv %s699
        %v701 = vmul.f32 %v700, %v664
        %v702 = vmul.f32 %v700, %v665
        %705 = vrot.lane.b32.xlu0 %v701, 127
        %v706 = vpop.permute.xlu0 %705
        %707 = vrot.lane.b32.xlu0 %v702, 127
        %v708 = vpop.permute.xlu0 %707
        %v711 = vadd.f32 %v677, %v706
        %v712 = vadd.f32 %v678, %v708
        %s713 = sld [smem:[#allocation2 + $0x52]]
        %v714 = vstv %s713
        %v715 = vmul.f32 %v714, %v664
        %v716 = vmul.f32 %v714, %v665
        %719 = vrot.lane.b32.xlu0 %v715, 127
        %v720 = vpop.permute.xlu0 %719
        %721 = vrot.lane.b32.xlu0 %v716, 127
        %v722 = vpop.permute.xlu0 %721
        %v725 = vadd.f32 %v683, %v720
        %v726 = vadd.f32 %v684, %v722
        %s727 = sld [smem:[#allocation2 + $0xb]]
        %v728 = vstv %s727
        %v729 = vmul.f32 %v728, %v664
        %v730 = vmul.f32 %v728, %v665
        %733 = vrot.lane.b32.xlu0 %v729, 126
        %v734 = vpop.permute.xlu0 %733
        %735 = vrot.lane.b32.xlu0 %v730, 126
        %v736 = vpop.permute.xlu0 %735
        %v739 = vadd.f32 %v697, %v734
        %v740 = vadd.f32 %v698, %v736
        %s741 = sld [smem:[#allocation2 + $0x2f]]
        %v742 = vstv %s741
        %v743 = vmul.f32 %v742, %v664
        %v744 = vmul.f32 %v742, %v665
        %747 = vrot.lane.b32.xlu0 %v743, 126
        %v748 = vpop.permute.xlu0 %747
        %749 = vrot.lane.b32.xlu0 %v744, 126
        %v750 = vpop.permute.xlu0 %749
        %v753 = vadd.f32 %v711, %v748
        %v754 = vadd.f32 %v712, %v750
        %s755 = sld [smem:[#allocation2 + $0x53]]
        %v756 = vstv %s755
        %v757 = vmul.f32 %v756, %v664
        %v758 = vmul.f32 %v756, %v665
        %761 = vrot.lane.b32.xlu0 %v757, 126
        %v762 = vpop.permute.xlu0 %761
        %763 = vrot.lane.b32.xlu0 %v758, 126
        %v764 = vpop.permute.xlu0 %763
        %v767 = vadd.f32 %v725, %v762
        %v768 = vadd.f32 %v726, %v764
        %s769 = sld [smem:[#allocation2 + $0xc]]
        %v770 = vstv %s769
        %v771 = vmul.f32 %v770, %v664
        %v772 = vmul.f32 %v770, %v665
        %v773 = vmul.f32 %v770, %v666
        %v777 = vrot.slane %v771, 1
        %v778 = vrot.slane %v772, 1
        %v779 = vsel %vm315, %v777, %v778
        %v780 = vrot.slane %v773, 1
        %v781 = vsel %vm315, %v778, %v780
        %v784 = vadd.f32 %v739, %v779
        %v785 = vadd.f32 %v740, %v781
        %s786 = sld [smem:[#allocation2 + $0x30]]
        %v787 = vstv %s786
        %v788 = vmul.f32 %v787, %v664
        %v789 = vmul.f32 %v787, %v665
        %v790 = vmul.f32 %v787, %v666
        %v794 = vrot.slane %v788, 1
        %v795 = vrot.slane %v789, 1
        %v796 = vsel %vm315, %v794, %v795
        %v797 = vrot.slane %v790, 1
        %v798 = vsel %vm315, %v795, %v797
        %v801 = vadd.f32 %v753, %v796
        %v802 = vadd.f32 %v754, %v798
        %s803 = sld [smem:[#allocation2 + $0x54]]
        %v804 = vstv %s803
        %v805 = vmul.f32 %v804, %v664
        %v806 = vmul.f32 %v804, %v665
        %v807 = vmul.f32 %v804, %v666
        %v811 = vrot.slane %v805, 1
        %v812 = vrot.slane %v806, 1
        %v813 = vsel %vm315, %v811, %v812
        %v814 = vrot.slane %v807, 1
        %v815 = vsel %vm315, %v812, %v814
        %v818 = vadd.f32 %v767, %v813
        %v819 = vadd.f32 %v768, %v815
        %s820 = sld [smem:[#allocation2 + $0xd]]
        %v821 = vstv %s820
        %v822 = vmul.f32 %v821, %v664
        %v823 = vmul.f32 %v821, %v665
        %v824 = vmul.f32 %v821, %v666
        %v828 = vrot.slane %v822, 1
        %v829 = vrot.slane %v823, 1
        %v830 = vsel %vm315, %v828, %v829
        %v831 = vrot.slane %v824, 1
        %v832 = vsel %vm315, %v829, %v831
        %833 = vrot.lane.b32.xlu0 %v830, 127
        %v834 = vpop.permute.xlu0 %833
        %835 = vrot.lane.b32.xlu0 %v832, 127
        %v836 = vpop.permute.xlu0 %835
        %v839 = vadd.f32 %v784, %v834
        %v840 = vadd.f32 %v785, %v836
        %s841 = sld [smem:[#allocation2 + $0x31]]
        %v842 = vstv %s841
        %v843 = vmul.f32 %v842, %v664
        %v844 = vmul.f32 %v842, %v665
        %v845 = vmul.f32 %v842, %v666
        %v849 = vrot.slane %v843, 1
        %v850 = vrot.slane %v844, 1
        %v851 = vsel %vm315, %v849, %v850
        %v852 = vrot.slane %v845, 1
        %v853 = vsel %vm315, %v850, %v852
        %854 = vrot.lane.b32.xlu0 %v851, 127
        %v855 = vpop.permute.xlu0 %854
        %856 = vrot.lane.b32.xlu0 %v853, 127
        %v857 = vpop.permute.xlu0 %856
        %v860 = vadd.f32 %v801, %v855
        %v861 = vadd.f32 %v802, %v857
        %s862 = sld [smem:[#allocation2 + $0x55]]
        %v863 = vstv %s862
        %v864 = vmul.f32 %v863, %v664
        %v865 = vmul.f32 %v863, %v665
        %v866 = vmul.f32 %v863, %v666
        %v870 = vrot.slane %v864, 1
        %v871 = vrot.slane %v865, 1
        %v872 = vsel %vm315, %v870, %v871
        %v873 = vrot.slane %v866, 1
        %v874 = vsel %vm315, %v871, %v873
        %875 = vrot.lane.b32.xlu0 %v872, 127
        %v876 = vpop.permute.xlu0 %875
        %877 = vrot.lane.b32.xlu0 %v874, 127
        %v878 = vpop.permute.xlu0 %877
        %v881 = vadd.f32 %v818, %v876
        %v882 = vadd.f32 %v819, %v878
        %s883 = sld [smem:[#allocation2 + $0xe]]
        %v884 = vstv %s883
        %v885 = vmul.f32 %v884, %v664
        %v886 = vmul.f32 %v884, %v665
        %v887 = vmul.f32 %v884, %v666
        %v891 = vrot.slane %v885, 1
        %v892 = vrot.slane %v886, 1
        %v893 = vsel %vm315, %v891, %v892
        %v894 = vrot.slane %v887, 1
        %v895 = vsel %vm315, %v892, %v894
        %896 = vrot.lane.b32.xlu0 %v893, 126
        %v897 = vpop.permute.xlu0 %896
        %898 = vrot.lane.b32.xlu0 %v895, 126
        %v899 = vpop.permute.xlu0 %898
        %v902 = vadd.f32 %v839, %v897
        %v903 = vadd.f32 %v840, %v899
        %s904 = sld [smem:[#allocation2 + $0x32]]
        %v905 = vstv %s904
        %v906 = vmul.f32 %v905, %v664
        %v907 = vmul.f32 %v905, %v665
        %v908 = vmul.f32 %v905, %v666
        %v912 = vrot.slane %v906, 1
        %v913 = vrot.slane %v907, 1
        %v914 = vsel %vm315, %v912, %v913
        %v915 = vrot.slane %v908, 1
        %v916 = vsel %vm315, %v913, %v915
        %917 = vrot.lane.b32.xlu0 %v914, 126
        %v918 = vpop.permute.xlu0 %917
        %919 = vrot.lane.b32.xlu0 %v916, 126
        %v920 = vpop.permute.xlu0 %919
        %v923 = vadd.f32 %v860, %v918
        %v924 = vadd.f32 %v861, %v920
        %s925 = sld [smem:[#allocation2 + $0x56]]
        %v926 = vstv %s925
        %v927 = vmul.f32 %v926, %v664
        %v928 = vmul.f32 %v926, %v665
        %v929 = vmul.f32 %v926, %v666
        %v933 = vrot.slane %v927, 1
        %v934 = vrot.slane %v928, 1
        %v935 = vsel %vm315, %v933, %v934
        %v936 = vrot.slane %v929, 1
        %v937 = vsel %vm315, %v934, %v936
        %938 = vrot.lane.b32.xlu0 %v935, 126
        %v939 = vpop.permute.xlu0 %938
        %940 = vrot.lane.b32.xlu0 %v937, 126
        %v941 = vpop.permute.xlu0 %940
        %v944 = vadd.f32 %v881, %v939
        %v945 = vadd.f32 %v882, %v941
        %s946 = sld [smem:[#allocation2 + $0xf]]
        %v947 = vstv %s946
        %v948 = vmul.f32 %v947, %v664
        %v949 = vmul.f32 %v947, %v665
        %v950 = vmul.f32 %v947, %v666
        %v954 = vrot.slane %v948, 2
        %v955 = vrot.slane %v949, 2
        %v956 = vsel %vm493, %v954, %v955
        %v957 = vrot.slane %v950, 2
        %v958 = vsel %vm493, %v955, %v957
        %v961 = vadd.f32 %v902, %v956
        %v962 = vadd.f32 %v903, %v958
        %s963 = sld [smem:[#allocation2 + $0x33]]
        %v964 = vstv %s963
        %v965 = vmul.f32 %v964, %v664
        %v966 = vmul.f32 %v964, %v665
        %v967 = vmul.f32 %v964, %v666
        %v971 = vrot.slane %v965, 2
        %v972 = vrot.slane %v966, 2
        %v973 = vsel %vm493, %v971, %v972
        %v974 = vrot.slane %v967, 2
        %v975 = vsel %vm493, %v972, %v974
        %v978 = vadd.f32 %v923, %v973
        %v979 = vadd.f32 %v924, %v975
        %s980 = sld [smem:[#allocation2 + $0x57]]
        %v981 = vstv %s980
        %v982 = vmul.f32 %v981, %v664
        %v983 = vmul.f32 %v981, %v665
        %v984 = vmul.f32 %v981, %v666
        %v988 = vrot.slane %v982, 2
        %v989 = vrot.slane %v983, 2
        %v990 = vsel %vm493, %v988, %v989
        %v991 = vrot.slane %v984, 2
        %v992 = vsel %vm493, %v989, %v991
        %v995 = vadd.f32 %v944, %v990
        %v996 = vadd.f32 %v945, %v992
        %s997 = sld [smem:[#allocation2 + $0x10]]
        %v998 = vstv %s997
        %v999 = vmul.f32 %v998, %v664
        %v1000 = vmul.f32 %v998, %v665
        %v1001 = vmul.f32 %v998, %v666
        %v1005 = vrot.slane %v999, 2
        %v1006 = vrot.slane %v1000, 2
        %v1007 = vsel %vm493, %v1005, %v1006
        %v1008 = vrot.slane %v1001, 2
        %v1009 = vsel %vm493, %v1006, %v1008
        %1010 = vrot.lane.b32.xlu0 %v1007, 127
        %v1011 = vpop.permute.xlu0 %1010
        %1012 = vrot.lane.b32.xlu0 %v1009, 127
        %v1013 = vpop.permute.xlu0 %1012
        %v1016 = vadd.f32 %v961, %v1011
        %v1017 = vadd.f32 %v962, %v1013
        %s1018 = sld [smem:[#allocation2 + $0x34]]
        %v1019 = vstv %s1018
        %v1020 = vmul.f32 %v1019, %v664
        %v1021 = vmul.f32 %v1019, %v665
        %v1022 = vmul.f32 %v1019, %v666
        %v1026 = vrot.slane %v1020, 2
        %v1027 = vrot.slane %v1021, 2
        %v1028 = vsel %vm493, %v1026, %v1027
        %v1029 = vrot.slane %v1022, 2
        %v1030 = vsel %vm493, %v1027, %v1029
        %1031 = vrot.lane.b32.xlu0 %v1028, 127
        %v1032 = vpop.permute.xlu0 %1031
        %1033 = vrot.lane.b32.xlu0 %v1030, 127
        %v1034 = vpop.permute.xlu0 %1033
        %v1037 = vadd.f32 %v978, %v1032
        %v1038 = vadd.f32 %v979, %v1034
        %s1039 = sld [smem:[#allocation2 + $0x58]]
        %v1040 = vstv %s1039
        %v1041 = vmul.f32 %v1040, %v664
        %v1042 = vmul.f32 %v1040, %v665
        %v1043 = vmul.f32 %v1040, %v666
        %v1047 = vrot.slane %v1041, 2
        %v1048 = vrot.slane %v1042, 2
        %v1049 = vsel %vm493, %v1047, %v1048
        %v1050 = vrot.slane %v1043, 2
        %v1051 = vsel %vm493, %v1048, %v1050
        %1052 = vrot.lane.b32.xlu0 %v1049, 127
        %v1053 = vpop.permute.xlu0 %1052
        %1054 = vrot.lane.b32.xlu0 %v1051, 127
        %v1055 = vpop.permute.xlu0 %1054
        %v1058 = vadd.f32 %v995, %v1053
        %v1059 = vadd.f32 %v996, %v1055
        %s1060 = sld [smem:[#allocation2 + $0x11]]
        %v1061 = vstv %s1060
        %v1062 = vmul.f32 %v1061, %v664
        %v1063 = vmul.f32 %v1061, %v665
        %v1064 = vmul.f32 %v1061, %v666
        %v1068 = vrot.slane %v1062, 2
        %v1069 = vrot.slane %v1063, 2
        %v1070 = vsel %vm493, %v1068, %v1069
        %v1071 = vrot.slane %v1064, 2
        %v1072 = vsel %vm493, %v1069, %v1071
        %1073 = vrot.lane.b32.xlu0 %v1070, 126
        %v1074 = vpop.permute.xlu0 %1073
        %1075 = vrot.lane.b32.xlu0 %v1072, 126
        %v1076 = vpop.permute.xlu0 %1075
        %v1079 = vadd.f32 %v1016, %v1074
        %v1080 = vadd.f32 %v1017, %v1076
        %s1081 = sld [smem:[#allocation2 + $0x35]]
        %v1082 = vstv %s1081
        %v1083 = vmul.f32 %v1082, %v664
        %v1084 = vmul.f32 %v1082, %v665
        %v1085 = vmul.f32 %v1082, %v666
        %v1089 = vrot.slane %v1083, 2
        %v1090 = vrot.slane %v1084, 2
        %v1091 = vsel %vm493, %v1089, %v1090
        %v1092 = vrot.slane %v1085, 2
        %v1093 = vsel %vm493, %v1090, %v1092
        %1094 = vrot.lane.b32.xlu0 %v1091, 126
        %v1095 = vpop.permute.xlu0 %1094
        %1096 = vrot.lane.b32.xlu0 %v1093, 126
        %v1097 = vpop.permute.xlu0 %1096
        %v1100 = vadd.f32 %v1037, %v1095
        %v1101 = vadd.f32 %v1038, %v1097
        %s1102 = sld [smem:[#allocation2 + $0x59]]
        %v1103 = vstv %s1102
        %v1104 = vmul.f32 %v1103, %v664
        %v1105 = vmul.f32 %v1103, %v665
        %v1106 = vmul.f32 %v1103, %v666
        %v1110 = vrot.slane %v1104, 2
        %v1111 = vrot.slane %v1105, 2
        %v1112 = vsel %vm493, %v1110, %v1111
        %v1113 = vrot.slane %v1106, 2
        %v1114 = vsel %vm493, %v1111, %v1113
        %1115 = vrot.lane.b32.xlu0 %v1112, 126
        %v1116 = vpop.permute.xlu0 %1115
        %1117 = vrot.lane.b32.xlu0 %v1114, 126
        %v1118 = vpop.permute.xlu0 %1117
        %v1121 = vadd.f32 %v1058, %v1116
        %v1122 = vadd.f32 %v1059, %v1118
        %s1123 = scalar_lea.vmem %s195, 48
        %v1124 = vld [vmem:[%s1123] sm:$0xff]
        %v1125 = vld [vmem:[%s1123 + $0x8] sm:$0xff]
        %v1126 = vld [vmem:[%s1123 + $0x10] sm:$0x3]
        %s1127 = sld [smem:[#allocation2 + $0x12]]
        %v1128 = vstv %s1127
        %v1129 = vmul.f32 %v1128, %v1124
        %v1130 = vmul.f32 %v1128, %v1125
        %v1131 = vadd.f32 %v1079, %v1129
        %v1132 = vadd.f32 %v1080, %v1130
        %s1133 = sld [smem:[#allocation2 + $0x36]]
        %v1134 = vstv %s1133
        %v1135 = vmul.f32 %v1134, %v1124
        %v1136 = vmul.f32 %v1134, %v1125
        %v1137 = vadd.f32 %v1100, %v1135
        %v1138 = vadd.f32 %v1101, %v1136
        %s1139 = sld [smem:[#allocation2 + $0x5a]]
        %v1140 = vstv %s1139
        %v1141 = vmul.f32 %v1140, %v1124
        %v1142 = vmul.f32 %v1140, %v1125
        %v1143 = vadd.f32 %v1121, %v1141
        %v1144 = vadd.f32 %v1122, %v1142
        %s1145 = sld [smem:[#allocation2 + $0x13]]
        %v1146 = vstv %s1145
        %v1147 = vmul.f32 %v1146, %v1124
        %v1148 = vmul.f32 %v1146, %v1125
        %1151 = vrot.lane.b32.xlu0 %v1147, 127
        %v1152 = vpop.permute.xlu0 %1151
        %1153 = vrot.lane.b32.xlu0 %v1148, 127
        %v1154 = vpop.permute.xlu0 %1153
        %v1157 = vadd.f32 %v1131, %v1152
        %v1158 = vadd.f32 %v1132, %v1154
        %s1159 = sld [smem:[#allocation2 + $0x37]]
        %v1160 = vstv %s1159
        %v1161 = vmul.f32 %v1160, %v1124
        %v1162 = vmul.f32 %v1160, %v1125
        %1165 = vrot.lane.b32.xlu0 %v1161, 127
        %v1166 = vpop.permute.xlu0 %1165
        %1167 = vrot.lane.b32.xlu0 %v1162, 127
        %v1168 = vpop.permute.xlu0 %1167
        %v1171 = vadd.f32 %v1137, %v1166
        %v1172 = vadd.f32 %v1138, %v1168
        %s1173 = sld [smem:[#allocation2 + $0x5b]]
        %v1174 = vstv %s1173
        %v1175 = vmul.f32 %v1174, %v1124
        %v1176 = vmul.f32 %v1174, %v1125
        %1179 = vrot.lane.b32.xlu0 %v1175, 127
        %v1180 = vpop.permute.xlu0 %1179
        %1181 = vrot.lane.b32.xlu0 %v1176, 127
        %v1182 = vpop.permute.xlu0 %1181
        %v1185 = vadd.f32 %v1143, %v1180
        %v1186 = vadd.f32 %v1144, %v1182
        %s1187 = sld [smem:[#allocation2 + $0x14]]
        %v1188 = vstv %s1187
        %v1189 = vmul.f32 %v1188, %v1124
        %v1190 = vmul.f32 %v1188, %v1125
        %1193 = vrot.lane.b32.xlu0 %v1189, 126
        %v1194 = vpop.permute.xlu0 %1193
        %1195 = vrot.lane.b32.xlu0 %v1190, 126
        %v1196 = vpop.permute.xlu0 %1195
        %v1199 = vadd.f32 %v1157, %v1194
        %v1200 = vadd.f32 %v1158, %v1196
        %s1201 = sld [smem:[#allocation2 + $0x38]]
        %v1202 = vstv %s1201
        %v1203 = vmul.f32 %v1202, %v1124
        %v1204 = vmul.f32 %v1202, %v1125
        %1207 = vrot.lane.b32.xlu0 %v1203, 126
        %v1208 = vpop.permute.xlu0 %1207
        %1209 = vrot.lane.b32.xlu0 %v1204, 126
        %v1210 = vpop.permute.xlu0 %1209
        %v1213 = vadd.f32 %v1171, %v1208
        %v1214 = vadd.f32 %v1172, %v1210
        %s1215 = sld [smem:[#allocation2 + $0x5c]]
        %v1216 = vstv %s1215
        %v1217 = vmul.f32 %v1216, %v1124
        %v1218 = vmul.f32 %v1216, %v1125
        %1221 = vrot.lane.b32.xlu0 %v1217, 126
        %v1222 = vpop.permute.xlu0 %1221
        %1223 = vrot.lane.b32.xlu0 %v1218, 126
        %v1224 = vpop.permute.xlu0 %1223
        %v1227 = vadd.f32 %v1185, %v1222
        %v1228 = vadd.f32 %v1186, %v1224
        %s1229 = sld [smem:[#allocation2 + $0x15]]
        %v1230 = vstv %s1229
        %v1231 = vmul.f32 %v1230, %v1124
        %v1232 = vmul.f32 %v1230, %v1125
        %v1233 = vmul.f32 %v1230, %v1126
        %v1237 = vrot.slane %v1231, 1
        %v1238 = vrot.slane %v1232, 1
        %v1239 = vsel %vm315, %v1237, %v1238
        %v1240 = vrot.slane %v1233, 1
        %v1241 = vsel %vm315, %v1238, %v1240
        %v1244 = vadd.f32 %v1199, %v1239
        %v1245 = vadd.f32 %v1200, %v1241
        %s1246 = sld [smem:[#allocation2 + $0x39]]
        %v1247 = vstv %s1246
        %v1248 = vmul.f32 %v1247, %v1124
        %v1249 = vmul.f32 %v1247, %v1125
        %v1250 = vmul.f32 %v1247, %v1126
        %v1254 = vrot.slane %v1248, 1
        %v1255 = vrot.slane %v1249, 1
        %v1256 = vsel %vm315, %v1254, %v1255
        %v1257 = vrot.slane %v1250, 1
        %v1258 = vsel %vm315, %v1255, %v1257
        %v1261 = vadd.f32 %v1213, %v1256
        %v1262 = vadd.f32 %v1214, %v1258
        %s1263 = sld [smem:[#allocation2 + $0x5d]]
        %v1264 = vstv %s1263
        %v1265 = vmul.f32 %v1264, %v1124
        %v1266 = vmul.f32 %v1264, %v1125
        %v1267 = vmul.f32 %v1264, %v1126
        %v1271 = vrot.slane %v1265, 1
        %v1272 = vrot.slane %v1266, 1
        %v1273 = vsel %vm315, %v1271, %v1272
        %v1274 = vrot.slane %v1267, 1
        %v1275 = vsel %vm315, %v1272, %v1274
        %v1278 = vadd.f32 %v1227, %v1273
        %v1279 = vadd.f32 %v1228, %v1275
        %s1280 = sld [smem:[#allocation2 + $0x16]]
        %v1281 = vstv %s1280
        %v1282 = vmul.f32 %v1281, %v1124
        %v1283 = vmul.f32 %v1281, %v1125
        %v1284 = vmul.f32 %v1281, %v1126
        %v1288 = vrot.slane %v1282, 1
        %v1289 = vrot.slane %v1283, 1
        %v1290 = vsel %vm315, %v1288, %v1289
        %v1291 = vrot.slane %v1284, 1
        %v1292 = vsel %vm315, %v1289, %v1291
        %1293 = vrot.lane.b32.xlu0 %v1290, 127
        %v1294 = vpop.permute.xlu0 %1293
        %1295 = vrot.lane.b32.xlu0 %v1292, 127
        %v1296 = vpop.permute.xlu0 %1295
        %v1299 = vadd.f32 %v1244, %v1294
        %v1300 = vadd.f32 %v1245, %v1296
        %s1301 = sld [smem:[#allocation2 + $0x3a]]
        %v1302 = vstv %s1301
        %v1303 = vmul.f32 %v1302, %v1124
        %v1304 = vmul.f32 %v1302, %v1125
        %v1305 = vmul.f32 %v1302, %v1126
        %v1309 = vrot.slane %v1303, 1
        %v1310 = vrot.slane %v1304, 1
        %v1311 = vsel %vm315, %v1309, %v1310
        %v1312 = vrot.slane %v1305, 1
        %v1313 = vsel %vm315, %v1310, %v1312
        %1314 = vrot.lane.b32.xlu0 %v1311, 127
        %v1315 = vpop.permute.xlu0 %1314
        %1316 = vrot.lane.b32.xlu0 %v1313, 127
        %v1317 = vpop.permute.xlu0 %1316
        %v1320 = vadd.f32 %v1261, %v1315
        %v1321 = vadd.f32 %v1262, %v1317
        %s1322 = sld [smem:[#allocation2 + $0x5e]]
        %v1323 = vstv %s1322
        %v1324 = vmul.f32 %v1323, %v1124
        %v1325 = vmul.f32 %v1323, %v1125
        %v1326 = vmul.f32 %v1323, %v1126
        %v1330 = vrot.slane %v1324, 1
        %v1331 = vrot.slane %v1325, 1
        %v1332 = vsel %vm315, %v1330, %v1331
        %v1333 = vrot.slane %v1326, 1
        %v1334 = vsel %vm315, %v1331, %v1333
        %1335 = vrot.lane.b32.xlu0 %v1332, 127
        %v1336 = vpop.permute.xlu0 %1335
        %1337 = vrot.lane.b32.xlu0 %v1334, 127
        %v1338 = vpop.permute.xlu0 %1337
        %v1341 = vadd.f32 %v1278, %v1336
        %v1342 = vadd.f32 %v1279, %v1338
        %s1343 = sld [smem:[#allocation2 + $0x17]]
        %v1344 = vstv %s1343
        %v1345 = vmul.f32 %v1344, %v1124
        %v1346 = vmul.f32 %v1344, %v1125
        %v1347 = vmul.f32 %v1344, %v1126
        %v1351 = vrot.slane %v1345, 1
        %v1352 = vrot.slane %v1346, 1
        %v1353 = vsel %vm315, %v1351, %v1352
        %v1354 = vrot.slane %v1347, 1
        %v1355 = vsel %vm315, %v1352, %v1354
        %1356 = vrot.lane.b32.xlu0 %v1353, 126
        %v1357 = vpop.permute.xlu0 %1356
        %1358 = vrot.lane.b32.xlu0 %v1355, 126
        %v1359 = vpop.permute.xlu0 %1358
        %v1362 = vadd.f32 %v1299, %v1357
        %v1363 = vadd.f32 %v1300, %v1359
        %s1364 = sld [smem:[#allocation2 + $0x3b]]
        %v1365 = vstv %s1364
        %v1366 = vmul.f32 %v1365, %v1124
        %v1367 = vmul.f32 %v1365, %v1125
        %v1368 = vmul.f32 %v1365, %v1126
        %v1372 = vrot.slane %v1366, 1
        %v1373 = vrot.slane %v1367, 1
        %v1374 = vsel %vm315, %v1372, %v1373
        %v1375 = vrot.slane %v1368, 1
        %v1376 = vsel %vm315, %v1373, %v1375
        %1377 = vrot.lane.b32.xlu0 %v1374, 126
        %v1378 = vpop.permute.xlu0 %1377
        %1379 = vrot.lane.b32.xlu0 %v1376, 126
        %v1380 = vpop.permute.xlu0 %1379
        %v1383 = vadd.f32 %v1320, %v1378
        %v1384 = vadd.f32 %v1321, %v1380
        %s1385 = sld [smem:[#allocation2 + $0x5f]]
        %v1386 = vstv %s1385
        %v1387 = vmul.f32 %v1386, %v1124
        %v1388 = vmul.f32 %v1386, %v1125
        %v1389 = vmul.f32 %v1386, %v1126
        %v1393 = vrot.slane %v1387, 1
        %v1394 = vrot.slane %v1388, 1
        %v1395 = vsel %vm315, %v1393, %v1394
        %v1396 = vrot.slane %v1389, 1
        %v1397 = vsel %vm315, %v1394, %v1396
        %1398 = vrot.lane.b32.xlu0 %v1395, 126
        %v1399 = vpop.permute.xlu0 %1398
        %1400 = vrot.lane.b32.xlu0 %v1397, 126
        %v1401 = vpop.permute.xlu0 %1400
        %v1404 = vadd.f32 %v1341, %v1399
        %v1405 = vadd.f32 %v1342, %v1401
        %s1406 = sld [smem:[#allocation2 + $0x18]]
        %v1407 = vstv %s1406
        %v1408 = vmul.f32 %v1407, %v1124
        %v1409 = vmul.f32 %v1407, %v1125
        %v1410 = vmul.f32 %v1407, %v1126
        %v1414 = vrot.slane %v1408, 2
        %v1415 = vrot.slane %v1409, 2
        %v1416 = vsel %vm493, %v1414, %v1415
        %v1417 = vrot.slane %v1410, 2
        %v1418 = vsel %vm493, %v1415, %v1417
        %v1421 = vadd.f32 %v1362, %v1416
        %v1422 = vadd.f32 %v1363, %v1418
        %s1423 = sld [smem:[#allocation2 + $0x3c]]
        %v1424 = vstv %s1423
        %v1425 = vmul.f32 %v1424, %v1124
        %v1426 = vmul.f32 %v1424, %v1125
        %v1427 = vmul.f32 %v1424, %v1126
        %v1431 = vrot.slane %v1425, 2
        %v1432 = vrot.slane %v1426, 2
        %v1433 = vsel %vm493, %v1431, %v1432
        %v1434 = vrot.slane %v1427, 2
        %v1435 = vsel %vm493, %v1432, %v1434
        %v1438 = vadd.f32 %v1383, %v1433
        %v1439 = vadd.f32 %v1384, %v1435
        %s1440 = sld [smem:[#allocation2 + $0x60]]
        %v1441 = vstv %s1440
        %v1442 = vmul.f32 %v1441, %v1124
        %v1443 = vmul.f32 %v1441, %v1125
        %v1444 = vmul.f32 %v1441, %v1126
        %v1448 = vrot.slane %v1442, 2
        %v1449 = vrot.slane %v1443, 2
        %v1450 = vsel %vm493, %v1448, %v1449
        %v1451 = vrot.slane %v1444, 2
        %v1452 = vsel %vm493, %v1449, %v1451
        %v1455 = vadd.f32 %v1404, %v1450
        %v1456 = vadd.f32 %v1405, %v1452
        %s1457 = sld [smem:[#allocation2 + $0x19]]
        %v1458 = vstv %s1457
        %v1459 = vmul.f32 %v1458, %v1124
        %v1460 = vmul.f32 %v1458, %v1125
        %v1461 = vmul.f32 %v1458, %v1126
        %v1465 = vrot.slane %v1459, 2
        %v1466 = vrot.slane %v1460, 2
        %v1467 = vsel %vm493, %v1465, %v1466
        %v1468 = vrot.slane %v1461, 2
        %v1469 = vsel %vm493, %v1466, %v1468
        %1470 = vrot.lane.b32.xlu0 %v1467, 127
        %v1471 = vpop.permute.xlu0 %1470
        %1472 = vrot.lane.b32.xlu0 %v1469, 127
        %v1473 = vpop.permute.xlu0 %1472
        %v1476 = vadd.f32 %v1421, %v1471
        %v1477 = vadd.f32 %v1422, %v1473
        %s1478 = sld [smem:[#allocation2 + $0x3d]]
        %v1479 = vstv %s1478
        %v1480 = vmul.f32 %v1479, %v1124
        %v1481 = vmul.f32 %v1479, %v1125
        %v1482 = vmul.f32 %v1479, %v1126
        %v1486 = vrot.slane %v1480, 2
        %v1487 = vrot.slane %v1481, 2
        %v1488 = vsel %vm493, %v1486, %v1487
        %v1489 = vrot.slane %v1482, 2
        %v1490 = vsel %vm493, %v1487, %v1489
        %1491 = vrot.lane.b32.xlu0 %v1488, 127
        %v1492 = vpop.permute.xlu0 %1491
        %1493 = vrot.lane.b32.xlu0 %v1490, 127
        %v1494 = vpop.permute.xlu0 %1493
        %v1497 = vadd.f32 %v1438, %v1492
        %v1498 = vadd.f32 %v1439, %v1494
        %s1499 = sld [smem:[#allocation2 + $0x61]]
        %v1500 = vstv %s1499
        %v1501 = vmul.f32 %v1500, %v1124
        %v1502 = vmul.f32 %v1500, %v1125
        %v1503 = vmul.f32 %v1500, %v1126
        %v1507 = vrot.slane %v1501, 2
        %v1508 = vrot.slane %v1502, 2
        %v1509 = vsel %vm493, %v1507, %v1508
        %v1510 = vrot.slane %v1503, 2
        %v1511 = vsel %vm493, %v1508, %v1510
        %1512 = vrot.lane.b32.xlu0 %v1509, 127
        %v1513 = vpop.permute.xlu0 %1512
        %1514 = vrot.lane.b32.xlu0 %v1511, 127
        %v1515 = vpop.permute.xlu0 %1514
        %v1518 = vadd.f32 %v1455, %v1513
        %v1519 = vadd.f32 %v1456, %v1515
        %s1520 = sld [smem:[#allocation2 + $0x1a]]
        %v1521 = vstv %s1520
        %v1522 = vmul.f32 %v1521, %v1124
        %v1523 = vmul.f32 %v1521, %v1125
        %v1524 = vmul.f32 %v1521, %v1126
        %v1528 = vrot.slane %v1522, 2
        %v1529 = vrot.slane %v1523, 2
        %v1530 = vsel %vm493, %v1528, %v1529
        %v1531 = vrot.slane %v1524, 2
        %v1532 = vsel %vm493, %v1529, %v1531
        %1533 = vrot.lane.b32.xlu0 %v1530, 126
        %v1534 = vpop.permute.xlu0 %1533
        %1535 = vrot.lane.b32.xlu0 %v1532, 126
        %v1536 = vpop.permute.xlu0 %1535
        %v1539 = vadd.f32 %v1476, %v1534
        %v1540 = vadd.f32 %v1477, %v1536
        %s1541 = sld [smem:[#allocation2 + $0x3e]]
        %v1542 = vstv %s1541
        %v1543 = vmul.f32 %v1542, %v1124
        %v1544 = vmul.f32 %v1542, %v1125
        %v1545 = vmul.f32 %v1542, %v1126
        %v1549 = vrot.slane %v1543, 2
        %v1550 = vrot.slane %v1544, 2
        %v1551 = vsel %vm493, %v1549, %v1550
        %v1552 = vrot.slane %v1545, 2
        %v1553 = vsel %vm493, %v1550, %v1552
        %1554 = vrot.lane.b32.xlu0 %v1551, 126
        %v1555 = vpop.permute.xlu0 %1554
        %1556 = vrot.lane.b32.xlu0 %v1553, 126
        %v1557 = vpop.permute.xlu0 %1556
        %v1560 = vadd.f32 %v1497, %v1555
        %v1561 = vadd.f32 %v1498, %v1557
        %s1562 = sld [smem:[#allocation2 + $0x62]]
        %v1563 = vstv %s1562
        %v1564 = vmul.f32 %v1563, %v1124
        %v1565 = vmul.f32 %v1563, %v1125
        %v1566 = vmul.f32 %v1563, %v1126
        %v1570 = vrot.slane %v1564, 2
        %v1571 = vrot.slane %v1565, 2
        %v1572 = vsel %vm493, %v1570, %v1571
        %v1573 = vrot.slane %v1566, 2
        %v1574 = vsel %vm493, %v1571, %v1573
        %1575 = vrot.lane.b32.xlu0 %v1572, 126
        %v1576 = vpop.permute.xlu0 %1575
        %1577 = vrot.lane.b32.xlu0 %v1574, 126
        %v1578 = vpop.permute.xlu0 %1577
        %v1581 = vadd.f32 %v1518, %v1576
        %v1582 = vadd.f32 %v1519, %v1578
        %s1583 = scalar_lea.vmem %s195, 72
        %v1584 = vld [vmem:[%s1583] sm:$0xff]
        %v1585 = vld [vmem:[%s1583 + $0x8] sm:$0xff]
        %v1586 = vld [vmem:[%s1583 + $0x10] sm:$0x3]
        %s1587 = sld [smem:[#allocation2 + $0x1b]]
        %v1588 = vstv %s1587
        %v1589 = vmul.f32 %v1588, %v1584
        %v1590 = vmul.f32 %v1588, %v1585
        %v1591 = vadd.f32 %v1539, %v1589
        %v1592 = vadd.f32 %v1540, %v1590
        %s1593 = sld [smem:[#allocation2 + $0x3f]]
        %v1594 = vstv %s1593
        %v1595 = vmul.f32 %v1594, %v1584
        %v1596 = vmul.f32 %v1594, %v1585
        %v1597 = vadd.f32 %v1560, %v1595
        %v1598 = vadd.f32 %v1561, %v1596
        %s1599 = sld [smem:[#allocation2 + $0x63]]
        %v1600 = vstv %s1599
        %v1601 = vmul.f32 %v1600, %v1584
        %v1602 = vmul.f32 %v1600, %v1585
        %v1603 = vadd.f32 %v1581, %v1601
        %v1604 = vadd.f32 %v1582, %v1602
        %s1605 = sld [smem:[#allocation2 + $0x1c]]
        %v1606 = vstv %s1605
        %v1607 = vmul.f32 %v1606, %v1584
        %v1608 = vmul.f32 %v1606, %v1585
        %1611 = vrot.lane.b32.xlu0 %v1607, 127
        %v1612 = vpop.permute.xlu0 %1611
        %1613 = vrot.lane.b32.xlu0 %v1608, 127
        %v1614 = vpop.permute.xlu0 %1613
        %v1617 = vadd.f32 %v1591, %v1612
        %v1618 = vadd.f32 %v1592, %v1614
        %s1619 = sld [smem:[#allocation2 + $0x40]]
        %v1620 = vstv %s1619
        %v1621 = vmul.f32 %v1620, %v1584
        %v1622 = vmul.f32 %v1620, %v1585
        %1625 = vrot.lane.b32.xlu0 %v1621, 127
        %v1626 = vpop.permute.xlu0 %1625
        %1627 = vrot.lane.b32.xlu0 %v1622, 127
        %v1628 = vpop.permute.xlu0 %1627
        %v1631 = vadd.f32 %v1597, %v1626
        %v1632 = vadd.f32 %v1598, %v1628
        %s1633 = sld [smem:[#allocation2 + $0x64]]
        %v1634 = vstv %s1633
        %v1635 = vmul.f32 %v1634, %v1584
        %v1636 = vmul.f32 %v1634, %v1585
        %1639 = vrot.lane.b32.xlu0 %v1635, 127
        %v1640 = vpop.permute.xlu0 %1639
        %1641 = vrot.lane.b32.xlu0 %v1636, 127
        %v1642 = vpop.permute.xlu0 %1641
        %v1645 = vadd.f32 %v1603, %v1640
        %v1646 = vadd.f32 %v1604, %v1642
        %s1647 = sld [smem:[#allocation2 + $0x1d]]
        %v1648 = vstv %s1647
        %v1649 = vmul.f32 %v1648, %v1584
        %v1650 = vmul.f32 %v1648, %v1585
        %1653 = vrot.lane.b32.xlu0 %v1649, 126
        %v1654 = vpop.permute.xlu0 %1653
        %1655 = vrot.lane.b32.xlu0 %v1650, 126
        %v1656 = vpop.permute.xlu0 %1655
        %v1659 = vadd.f32 %v1617, %v1654
        %v1660 = vadd.f32 %v1618, %v1656
        %s1661 = sld [smem:[#allocation2 + $0x41]]
        %v1662 = vstv %s1661
        %v1663 = vmul.f32 %v1662, %v1584
        %v1664 = vmul.f32 %v1662, %v1585
        %1667 = vrot.lane.b32.xlu0 %v1663, 126
        %v1668 = vpop.permute.xlu0 %1667
        %1669 = vrot.lane.b32.xlu0 %v1664, 126
        %v1670 = vpop.permute.xlu0 %1669
        %v1673 = vadd.f32 %v1631, %v1668
        %v1674 = vadd.f32 %v1632, %v1670
        %s1675 = sld [smem:[#allocation2 + $0x65]]
        %v1676 = vstv %s1675
        %v1677 = vmul.f32 %v1676, %v1584
        %v1678 = vmul.f32 %v1676, %v1585
        %1681 = vrot.lane.b32.xlu0 %v1677, 126
        %v1682 = vpop.permute.xlu0 %1681
        %1683 = vrot.lane.b32.xlu0 %v1678, 126
        %v1684 = vpop.permute.xlu0 %1683
        %v1687 = vadd.f32 %v1645, %v1682
        %v1688 = vadd.f32 %v1646, %v1684
        %s1689 = sld [smem:[#allocation2 + $0x1e]]
        %v1690 = vstv %s1689
        %v1691 = vmul.f32 %v1690, %v1584
        %v1692 = vmul.f32 %v1690, %v1585
        %v1693 = vmul.f32 %v1690, %v1586
        %v1697 = vrot.slane %v1691, 1
        %v1698 = vrot.slane %v1692, 1
        %v1699 = vsel %vm315, %v1697, %v1698
        %v1700 = vrot.slane %v1693, 1
        %v1701 = vsel %vm315, %v1698, %v1700
        %v1704 = vadd.f32 %v1659, %v1699
        %v1705 = vadd.f32 %v1660, %v1701
        %s1706 = sld [smem:[#allocation2 + $0x42]]
        %v1707 = vstv %s1706
        %v1708 = vmul.f32 %v1707, %v1584
        %v1709 = vmul.f32 %v1707, %v1585
        %v1710 = vmul.f32 %v1707, %v1586
        %v1714 = vrot.slane %v1708, 1
        %v1715 = vrot.slane %v1709, 1
        %v1716 = vsel %vm315, %v1714, %v1715
        %v1717 = vrot.slane %v1710, 1
        %v1718 = vsel %vm315, %v1715, %v1717
        %v1721 = vadd.f32 %v1673, %v1716
        %v1722 = vadd.f32 %v1674, %v1718
        %s1723 = sld [smem:[#allocation2 + $0x66]]
        %v1724 = vstv %s1723
        %v1725 = vmul.f32 %v1724, %v1584
        %v1726 = vmul.f32 %v1724, %v1585
        %v1727 = vmul.f32 %v1724, %v1586
        %v1731 = vrot.slane %v1725, 1
        %v1732 = vrot.slane %v1726, 1
        %v1733 = vsel %vm315, %v1731, %v1732
        %v1734 = vrot.slane %v1727, 1
        %v1735 = vsel %vm315, %v1732, %v1734
        %v1738 = vadd.f32 %v1687, %v1733
        %v1739 = vadd.f32 %v1688, %v1735
        %s1740 = sld [smem:[#allocation2 + $0x1f]]
        %v1741 = vstv %s1740
        %v1742 = vmul.f32 %v1741, %v1584
        %v1743 = vmul.f32 %v1741, %v1585
        %v1744 = vmul.f32 %v1741, %v1586
        %v1748 = vrot.slane %v1742, 1
        %v1749 = vrot.slane %v1743, 1
        %v1750 = vsel %vm315, %v1748, %v1749
        %v1751 = vrot.slane %v1744, 1
        %v1752 = vsel %vm315, %v1749, %v1751
        %1753 = vrot.lane.b32.xlu0 %v1750, 127
        %v1754 = vpop.permute.xlu0 %1753
        %1755 = vrot.lane.b32.xlu0 %v1752, 127
        %v1756 = vpop.permute.xlu0 %1755
        %v1759 = vadd.f32 %v1704, %v1754
        %v1760 = vadd.f32 %v1705, %v1756
        %s1761 = sld [smem:[#allocation2 + $0x43]]
        %v1762 = vstv %s1761
        %v1763 = vmul.f32 %v1762, %v1584
        %v1764 = vmul.f32 %v1762, %v1585
        %v1765 = vmul.f32 %v1762, %v1586
        %v1769 = vrot.slane %v1763, 1
        %v1770 = vrot.slane %v1764, 1
        %v1771 = vsel %vm315, %v1769, %v1770
        %v1772 = vrot.slane %v1765, 1
        %v1773 = vsel %vm315, %v1770, %v1772
        %1774 = vrot.lane.b32.xlu0 %v1771, 127
        %v1775 = vpop.permute.xlu0 %1774
        %1776 = vrot.lane.b32.xlu0 %v1773, 127
        %v1777 = vpop.permute.xlu0 %1776
        %v1780 = vadd.f32 %v1721, %v1775
        %v1781 = vadd.f32 %v1722, %v1777
        %s1782 = sld [smem:[#allocation2 + $0x67]]
        %v1783 = vstv %s1782
        %v1784 = vmul.f32 %v1783, %v1584
        %v1785 = vmul.f32 %v1783, %v1585
        %v1786 = vmul.f32 %v1783, %v1586
        %v1790 = vrot.slane %v1784, 1
        %v1791 = vrot.slane %v1785, 1
        %v1792 = vsel %vm315, %v1790, %v1791
        %v1793 = vrot.slane %v1786, 1
        %v1794 = vsel %vm315, %v1791, %v1793
        %1795 = vrot.lane.b32.xlu0 %v1792, 127
        %v1796 = vpop.permute.xlu0 %1795
        %1797 = vrot.lane.b32.xlu0 %v1794, 127
        %v1798 = vpop.permute.xlu0 %1797
        %v1801 = vadd.f32 %v1738, %v1796
        %v1802 = vadd.f32 %v1739, %v1798
        %s1803 = sld [smem:[#allocation2 + $0x20]]
        %v1804 = vstv %s1803
        %v1805 = vmul.f32 %v1804, %v1584
        %v1806 = vmul.f32 %v1804, %v1585
        %v1807 = vmul.f32 %v1804, %v1586
        %v1811 = vrot.slane %v1805, 1
        %v1812 = vrot.slane %v1806, 1
        %v1813 = vsel %vm315, %v1811, %v1812
        %v1814 = vrot.slane %v1807, 1
        %v1815 = vsel %vm315, %v1812, %v1814
        %1816 = vrot.lane.b32.xlu0 %v1813, 126
        %v1817 = vpop.permute.xlu0 %1816
        %1818 = vrot.lane.b32.xlu0 %v1815, 126
        %v1819 = vpop.permute.xlu0 %1818
        %v1822 = vadd.f32 %v1759, %v1817
        %v1823 = vadd.f32 %v1760, %v1819
        %s1824 = sld [smem:[#allocation2 + $0x44]]
        %v1825 = vstv %s1824
        %v1826 = vmul.f32 %v1825, %v1584
        %v1827 = vmul.f32 %v1825, %v1585
        %v1828 = vmul.f32 %v1825, %v1586
        %v1832 = vrot.slane %v1826, 1
        %v1833 = vrot.slane %v1827, 1
        %v1834 = vsel %vm315, %v1832, %v1833
        %v1835 = vrot.slane %v1828, 1
        %v1836 = vsel %vm315, %v1833, %v1835
        %1837 = vrot.lane.b32.xlu0 %v1834, 126
        %v1838 = vpop.permute.xlu0 %1837
        %1839 = vrot.lane.b32.xlu0 %v1836, 126
        %v1840 = vpop.permute.xlu0 %1839
        %v1843 = vadd.f32 %v1780, %v1838
        %v1844 = vadd.f32 %v1781, %v1840
        %s1845 = sld [smem:[#allocation2 + $0x68]]
        %v1846 = vstv %s1845
        %v1847 = vmul.f32 %v1846, %v1584
        %v1848 = vmul.f32 %v1846, %v1585
        %v1849 = vmul.f32 %v1846, %v1586
        %v1853 = vrot.slane %v1847, 1
        %v1854 = vrot.slane %v1848, 1
        %v1855 = vsel %vm315, %v1853, %v1854
        %v1856 = vrot.slane %v1849, 1
        %v1857 = vsel %vm315, %v1854, %v1856
        %1858 = vrot.lane.b32.xlu0 %v1855, 126
        %v1859 = vpop.permute.xlu0 %1858
        %1860 = vrot.lane.b32.xlu0 %v1857, 126
        %v1861 = vpop.permute.xlu0 %1860
        %v1864 = vadd.f32 %v1801, %v1859
        %v1865 = vadd.f32 %v1802, %v1861
        %s1866 = sld [smem:[#allocation2 + $0x21]]
        %v1867 = vstv %s1866
        %v1868 = vmul.f32 %v1867, %v1584
        %v1869 = vmul.f32 %v1867, %v1585
        %v1870 = vmul.f32 %v1867, %v1586
        %v1874 = vrot.slane %v1868, 2
        %v1875 = vrot.slane %v1869, 2
        %v1876 = vsel %vm493, %v1874, %v1875
        %v1877 = vrot.slane %v1870, 2
        %v1878 = vsel %vm493, %v1875, %v1877
        %v1881 = vadd.f32 %v1822, %v1876
        %v1882 = vadd.f32 %v1823, %v1878
        %s1883 = sld [smem:[#allocation2 + $0x45]]
        %v1884 = vstv %s1883
        %v1885 = vmul.f32 %v1884, %v1584
        %v1886 = vmul.f32 %v1884, %v1585
        %v1887 = vmul.f32 %v1884, %v1586
        %v1891 = vrot.slane %v1885, 2
        %v1892 = vrot.slane %v1886, 2
        %v1893 = vsel %vm493, %v1891, %v1892
        %v1894 = vrot.slane %v1887, 2
        %v1895 = vsel %vm493, %v1892, %v1894
        %v1898 = vadd.f32 %v1843, %v1893
        %v1899 = vadd.f32 %v1844, %v1895
        %s1900 = sld [smem:[#allocation2 + $0x69]]
        %v1901 = vstv %s1900
        %v1902 = vmul.f32 %v1901, %v1584
        %v1903 = vmul.f32 %v1901, %v1585
        %v1904 = vmul.f32 %v1901, %v1586
        %v1908 = vrot.slane %v1902, 2
        %v1909 = vrot.slane %v1903, 2
        %v1910 = vsel %vm493, %v1908, %v1909
        %v1911 = vrot.slane %v1904, 2
        %v1912 = vsel %vm493, %v1909, %v1911
        %v1915 = vadd.f32 %v1864, %v1910
        %v1916 = vadd.f32 %v1865, %v1912
        %s1917 = sld [smem:[#allocation2 + $0x22]]
        %v1918 = vstv %s1917
        %v1919 = vmul.f32 %v1918, %v1584
        %v1920 = vmul.f32 %v1918, %v1585
        %v1921 = vmul.f32 %v1918, %v1586
        %v1925 = vrot.slane %v1919, 2
        %v1926 = vrot.slane %v1920, 2
        %v1927 = vsel %vm493, %v1925, %v1926
        %v1928 = vrot.slane %v1921, 2
        %v1929 = vsel %vm493, %v1926, %v1928
        %1930 = vrot.lane.b32.xlu0 %v1927, 127
        %v1931 = vpop.permute.xlu0 %1930
        %1932 = vrot.lane.b32.xlu0 %v1929, 127
        %v1933 = vpop.permute.xlu0 %1932
        %v1936 = vadd.f32 %v1881, %v1931
        %v1937 = vadd.f32 %v1882, %v1933
        %s1938 = sld [smem:[#allocation2 + $0x46]]
        %v1939 = vstv %s1938
        %v1940 = vmul.f32 %v1939, %v1584
        %v1941 = vmul.f32 %v1939, %v1585
        %v1942 = vmul.f32 %v1939, %v1586
        %v1946 = vrot.slane %v1940, 2
        %v1947 = vrot.slane %v1941, 2
        %v1948 = vsel %vm493, %v1946, %v1947
        %v1949 = vrot.slane %v1942, 2
        %v1950 = vsel %vm493, %v1947, %v1949
        %1951 = vrot.lane.b32.xlu0 %v1948, 127
        %v1952 = vpop.permute.xlu0 %1951
        %1953 = vrot.lane.b32.xlu0 %v1950, 127
        %v1954 = vpop.permute.xlu0 %1953
        %v1957 = vadd.f32 %v1898, %v1952
        %v1958 = vadd.f32 %v1899, %v1954
        %s1959 = sld [smem:[#allocation2 + $0x6a]]
        %v1960 = vstv %s1959
        %v1961 = vmul.f32 %v1960, %v1584
        %v1962 = vmul.f32 %v1960, %v1585
        %v1963 = vmul.f32 %v1960, %v1586
        %v1967 = vrot.slane %v1961, 2
        %v1968 = vrot.slane %v1962, 2
        %v1969 = vsel %vm493, %v1967, %v1968
        %v1970 = vrot.slane %v1963, 2
        %v1971 = vsel %vm493, %v1968, %v1970
        %1972 = vrot.lane.b32.xlu0 %v1969, 127
        %v1973 = vpop.permute.xlu0 %1972
        %1974 = vrot.lane.b32.xlu0 %v1971, 127
        %v1975 = vpop.permute.xlu0 %1974
        %v1978 = vadd.f32 %v1915, %v1973
        %v1979 = vadd.f32 %v1916, %v1975
        %s1980 = sld [smem:[#allocation2 + $0x23]]
        %v1981 = vstv %s1980
        %v1982 = vmul.f32 %v1981, %v1584
        %v1983 = vmul.f32 %v1981, %v1585
        %v1984 = vmul.f32 %v1981, %v1586
        %v1988 = vrot.slane %v1982, 2
        %v1989 = vrot.slane %v1983, 2
        %v1990 = vsel %vm493, %v1988, %v1989
        %v1991 = vrot.slane %v1984, 2
        %v1992 = vsel %vm493, %v1989, %v1991
        %1993 = vrot.lane.b32.xlu0 %v1990, 126
        %v1994 = vpop.permute.xlu0 %1993
        %1995 = vrot.lane.b32.xlu0 %v1992, 126
        %v1996 = vpop.permute.xlu0 %1995
        %v1999 = vadd.f32 %v1936, %v1994
        %v2000 = vadd.f32 %v1937, %v1996
        %s2001 = sld [smem:[#allocation2 + $0x47]]
        %v2002 = vstv %s2001
        %v2003 = vmul.f32 %v2002, %v1584
        %v2004 = vmul.f32 %v2002, %v1585
        %v2005 = vmul.f32 %v2002, %v1586
        %v2009 = vrot.slane %v2003, 2
        %v2010 = vrot.slane %v2004, 2
        %v2011 = vsel %vm493, %v2009, %v2010
        %v2012 = vrot.slane %v2005, 2
        %v2013 = vsel %vm493, %v2010, %v2012
        %2014 = vrot.lane.b32.xlu0 %v2011, 126
        %v2015 = vpop.permute.xlu0 %2014
        %2016 = vrot.lane.b32.xlu0 %v2013, 126
        %v2017 = vpop.permute.xlu0 %2016
        %v2020 = vadd.f32 %v1957, %v2015
        %v2021 = vadd.f32 %v1958, %v2017
        %s2022 = sld [smem:[#allocation2 + $0x6b]]
        %v2023 = vstv %s2022
        %v2024 = vmul.f32 %v2023, %v1584
        %v2025 = vmul.f32 %v2023, %v1585
        %v2026 = vmul.f32 %v2023, %v1586
        %v2030 = vrot.slane %v2024, 2
        %v2031 = vrot.slane %v2025, 2
        %v2032 = vsel %vm493, %v2030, %v2031
        %v2033 = vrot.slane %v2026, 2
        %v2034 = vsel %vm493, %v2031, %v2033
        %2035 = vrot.lane.b32.xlu0 %v2032, 126
        %v2036 = vpop.permute.xlu0 %2035
        %2037 = vrot.lane.b32.xlu0 %v2034, 126
        %v2038 = vpop.permute.xlu0 %2037
        %v2041 = vadd.f32 %v1978, %v2036
        %v2042 = vadd.f32 %v1979, %v2038
        %v2043 = vmul.f32 %v1999, %v1999
        %v2044 = vmul.f32 %v2000, %v2000
        %v2045 = vmul.f32 %v2020, %v2020
        %v2046 = vmul.f32 %v2021, %v2021
        %v2047 = vadd.f32 %v2043, %v2045
        %v2048 = vadd.f32 %v2044, %v2046
        %v2049 = vmul.f32 %v2041, %v2041
        %v2050 = vmul.f32 %v2042, %v2042
        %v2051 = vadd.f32 %v2047, %v2049
        %v2052 = vadd.f32 %v2048, %v2050
        %v2053 = vmax.f32 %v2051, 1e-24
        %v2054 = vmax.f32 %v2052, 1e-24
        %v2055 = vrsqrt.pop %v2053
        %v2056 = vmul.f32 %v2055, %v2053
        %v2057 = vmul.f32 %v2056, %v2055
        %v2058 = vmul.f32 0.5, %v2057
        %v2059 = vsub.f32 1.5, %v2058
        %v2060 = vmul.f32 %v2055, %v2059
        %vm2061 = vweird.f32 %v2053
        %vm2062 = vweird.f32 %v2055
        %vm2063 = vmor %vm2061, %vm2062
        %v2064 = vsel %vm2063, %v2055, %v2060
        %v2065 = vrsqrt.pop %v2054
        %v2066 = vmul.f32 %v2065, %v2054
        %v2067 = vmul.f32 %v2066, %v2065
        %v2068 = vmul.f32 0.5, %v2067
        %v2069 = vsub.f32 1.5, %v2068
        %v2070 = vmul.f32 %v2065, %v2069
        %vm2071 = vweird.f32 %v2054
        %vm2072 = vweird.f32 %v2065
        %vm2073 = vmor %vm2071, %vm2072
        %v2074 = vsel %vm2073, %v2065, %v2070
        %v2075 = vmul.f32 %v1999, %v2064
        %v2076 = vmul.f32 %v2000, %v2074
        %vm2077 = vcmask 130048
        %2078 = vst.msk [vmem:[%s190] sm:$0xff] %vm2077, %v2075
        %2079 = vst.msk [vmem:[%s190 + $0x8] sm:$0xff] %vm2077, %v2076
        %v2080 = vmul.f32 %v2020, %v2064
        %v2081 = vmul.f32 %v2021, %v2074
        %s2082 = scalar_lea.vmem %s190, 16 [#allocation7]
        %2083 = vst.msk [vmem:[%s2082] sm:$0xff] %vm2077, %v2080
        %2084 = vst.msk [vmem:[%s2082 + $0x8] sm:$0xff] %vm2077, %v2081
        %v2085 = vmul.f32 %v2041, %v2064
        %v2086 = vmul.f32 %v2042, %v2074
        %s2087 = scalar_lea.vmem %s190, 32 [#allocation7]
        %2088 = vst.msk [vmem:[%s2087] sm:$0xff] %vm2077, %v2085
        %2089 = vst.msk [vmem:[%s2087 + $0x8] sm:$0xff] %vm2077, %v2086
        %s2090 = sand.u32 %s95, 1
        %s2091 = scalar_lea.sflag [#allocation3], %s2090
        %s2092 = sand.u32 %s95, 1
        %s2093 = smul.addr %s2092, 48
        %s2094 = scalar_lea.vmem [#allocation7], %s2093
        // Predicated region
        $region41: #{tpu_custom_call.1} parent=31 // pred_check
          %p2095 = pneg %p105
        $region42: #{tpu_custom_call.1} parent=31 // pred_check_branch
          %2097 = sbr.rel (%p2095) target = $region44
        $region43: #{tpu_custom_call.1} parent=31 // pred_region
          %2099 = vsyncadd %s2091, 0
          %s2100 = smul.addr %s19, 6
          %s2101 = smul.addr %s2100, 8
          %s2102 = scalar_lea.hbm %s3, %s2101
          %s2103 = sshll.u32 %s2094, 4
          %s2104 = int_to_ptr.vmem [resolvable:$true] %s2103
          %s2105 = sshll.u32 %s2102, 4
          %s2106 = int_to_ptr.hbm [resolvable:$true] %s2105
          %2111 = dma.vmem_to_hbm [thread:$0]  %s2104, 768, %s2106, %s2091, 128, 128, 8
        $region44: #{tpu_custom_call.1} parent=31 // pred_fallthru
          _
      $region32: #{tpu_custom_call.1} parent=5 // pred_fallthru
        _
      %p2112 = scmp.le.s32.totalorder 2, %s14
      // Predicated region
      $region45: #{tpu_custom_call.1} parent=5 // pred_check
        %p2113 = pneg %p2112
      $region46: #{tpu_custom_call.1} parent=5 // pred_check_branch
        %2115 = sbr.rel (%p2113) target = $region48
      $region47: #{tpu_custom_call.1} parent=5 // pred_region
        %s2116 = ssub.s32 %s14, 2
        // Predicated region
        $region49: #{tpu_custom_call.1} parent=47 // pred_check
          %p2117 = pneg %p111
        $region50: #{tpu_custom_call.1} parent=47 // pred_check_branch
          %2119 = sbr.rel (%p2117) target = $region52
        $region51: #{tpu_custom_call.1} parent=47 // pred_region
          %s2120 = sand.u32 %s96, 1
          %s2121 = scalar_lea.sflag [#allocation3], %s2120
          %s2122 = sand.u32 %s96, 1
          %s2123 = smul.addr %s2122, 48
          %s2124 = scalar_lea.vmem [#allocation7], %s2123
          %2126 = dma.done %s2121, 768
        $region52: #{tpu_custom_call.1} parent=47 // pred_fallthru
          _
      $region48: #{tpu_custom_call.1} parent=5 // pred_fallthru
        _
    $region6: #{tpu_custom_call.1} parent=1 // loop_footer
      %s18 = sadd.s32 1, %s14
    $region7: #{tpu_custom_call.1} parent=1 // loop_footer_branch
      %13 = sbr.rel target = $region3
    $region8: #{tpu_custom_call.1} parent=1 // loop_exit
      _
    %2127 = vsyncpa [#allocation3], 1
    %s2128 = scalar_lea.sflag [#allocation3], 1
    %2129 = vsyncpa %s2128, 1
    %2130 = vsyncpa [#allocation4], 1
    %s2131 = scalar_lea.sflag [#allocation4], 1
    %2132 = vsyncpa %s2131, 1
    %2133 = vsyncpa [#allocation6], 1

</llo_original>
